<compile_context>
chip_gen: v6e
topology: v6e:2x2x1
jax: 0.10.0
libtpu: 0.0.40
codegen_flags: <defaults>
</compile_context>

<pallas_src>
import jax
import jax.numpy as jnp
from jax.experimental import pallas as pl
from jax.experimental.pallas import tpu as pltpu


def _round_up(n, m):
    return (n + m - 1) // m * m


def _pick_graphs_per_block(B, N):
    """Largest divisor G of B giving >= 2 grid steps and M = G*N <= 256 MXU rows."""
    best = 1
    for g in range(1, B + 1):
        if B % g == 0 and B // g >= 2 and g * N <= 256:
            best = g
    return best


def subgraph_gnn_kernel(a_ref, xbd_ref, w1_ref, b1_ref, w2_ref, b2_ref, o_ref):
    """Fused forward for one group of G subgraphs (M = G*N rows).

    Ref shapes (all VMEM):
      a_ref   : [G*N, 4*G*N]   bf16  lane-stacked block-diag [I | hop1 | hop2 | hop3]
      xbd_ref : [4*G*N, 4*Din] bf16  k-block-diagonal expansion of the node features
      w1_ref  : [4*Din, 4*H1]  bf16  block-diagonal layer-1 weights
      b1_ref  : [1, 4*H1]      f32   concat of the four layer-1 biases
      w2_ref  : [4*H1, H2p]    bf16  row-stacked layer-2 weights (H2 padded to 128)
      b2_ref  : [1, H2p]       f32   sum of the four layer-2 biases (padded)
      o_ref   : [G*N, H2p]     bf16
    """
    # Hop propagation for all four branches and all G graphs: one lane-dense K=4*G*N
    # matmul whose result is already the lane-concatenated branch input [G*N, 4*Din].
    xcat = jnp.dot(a_ref[...], xbd_ref[...], preferred_element_type=jnp.float32)
    xcat = xcat.astype(jnp.bfloat16)

    # Fused layer 1 (all branches): one K=4*Din matmul, one bias add, one ReLU.
    h = jnp.dot(xcat, w1_ref[...], preferred_element_type=jnp.float32)
    h = jnp.maximum(h + b1_ref[...], 0.0).astype(jnp.bfloat16)          # [G*N, 4*H1]

    # Fused layer 2 + final 4-way branch sum: one K=4*H1 matmul, one summed bias.
    out = jnp.dot(h, w2_ref[...], preferred_element_type=jnp.float32) + b2_ref[...]
    o_ref[...] = out.astype(o_ref.dtype)                                # lane-dense vst


def subgraph_gnn(x, walk_feats, hop1, hop2, hop3, params, use_rw=True,
                 graphs_per_block=None):
    """Batched forward.  x:[B,N,F], walk_feats:[B,N,R], hopK:[B,N,N] -> [B,N,H2] f32."""
    W1, b1, W2, b2 = params            # [4,Din,H1], [4,1,H1], [4,H1,H2], [4,1,H2]
    f32, bf16 = jnp.float32, jnp.bfloat16
    X = jnp.concatenate([x, walk_feats], axis=-1) if use_rw else x
    B, N, Din = X.shape
    H1 = W1.shape[-1]
    H2 = W2.shape[-1]
    assert W1.shape[1] == Din, "params in_dim does not match concatenated feature dim"

    if graphs_per_block is None:
        graphs_per_block = _pick_graphs_per_block(B, N)
    G = graphs_per_block
    assert B % G == 0
    n_groups = B // G
    GN = G * N
    assert GN % 8 == 0 or n_groups == 1, "G*N must be a multiple of 8 when grid > 1"
    H2p = _round_up(H2, 128)                      # lane-dense output width

    # ---- wrapper-side operand packing (bf16 MXU operands; f32 accumulation in-kernel) ----
    # A_wide[o][g*N+n, k*G*N + g*N + m] = hop_k[o*G+g, n, m]   with hop_0 = I.
    eye_n = jnp.eye(N, dtype=f32)
    S = jnp.stack([jnp.broadcast_to(eye_n, (B, N, N)),
                   hop1.astype(f32), hop2.astype(f32), hop3.astype(f32)], axis=1)
    S = S.reshape(n_groups, G, 4, N, N)
    A_wide = jnp.einsum("ogknm,gh->ognkhm", S, jnp.eye(G, dtype=f32))
    A_wide = A_wide.reshape(n_groups * GN, 4 * GN).astype(bf16)   # 0/1 exact in bf16

    # X_bd[o][k*G*N + m, k'*Din + d] = X[o][m, d] * (k == k')    (k-block-diagonal).
    Xg = X.astype(f32).reshape(n_groups, GN, Din)
    Xbd = jnp.einsum("oMd,kj->okMjd", Xg, jnp.eye(4, dtype=f32))
    Xbd = Xbd.reshape(n_groups * 4 * GN, 4 * Din).astype(bf16)

    # True block-diagonal layer-1 weight + concatenated bias (one K=4*Din matmul).
    W1bd = jnp.zeros((4 * Din, 4 * H1), f32)
    for k in range(4):
        W1bd = W1bd.at[k * Din:(k + 1) * Din, k * H1:(k + 1) * H1].set(W1[k])
    W1bd = W1bd.astype(bf16)
    b1cat = b1.reshape(1, 4 * H1).astype(f32)

    # Row-stacked layer-2 weight (4-way branch sum folds into one K=4*H1 matmul).
    W2cat = jnp.pad(W2.reshape(4 * H1, H2), ((0, 0), (0, H2p - H2))).astype(bf16)
    b2sum = jnp.pad(b2.sum(axis=0), ((0, 0), (0, H2p - H2))).astype(f32)

    # Cost / VMEM bookkeeping.
    flops = n_groups * 2 * GN * (4 * GN * 4 * Din + 4 * Din * 4 * H1 + 4 * H1 * H2p)
    bytes_accessed = (2 * (A_wide.size + Xbd.size + W1bd.size + W2cat.size)
                      + 4 * (b1cat.size + b2sum.size) + 2 * B * N * H2p)
    step_bytes = (2 * (GN * 4 * GN + 4 * GN * 4 * Din + W1bd.size + W2cat.size + GN * H2p)
                  + 4 * (b1cat.size + b2sum.size))
    vmem_limit = int(min(64 * 2**20, max(16 * 2**20, 6 * step_bytes)))

    out = pl.pallas_call(
        subgraph_gnn_kernel,
        out_shape=jax.ShapeDtypeStruct((B * N, H2p), bf16),
        grid_spec=pl.GridSpec(
            grid=(n_groups,),
            in_specs=[
                # TODO(synk): if xprof shows this adjacency DMA still exposed, add
                # pipeline_mode=pl.Buffered(3) to this spec only.
                pl.BlockSpec((GN, 4 * GN), lambda g: (g, 0)),
                pl.BlockSpec((4 * GN, 4 * Din), lambda g: (g, 0)),
                pl.BlockSpec((4 * Din, 4 * H1), lambda g: (0, 0)),
                pl.BlockSpec((1, 4 * H1), lambda g: (0, 0)),
                pl.BlockSpec((4 * H1, H2p), lambda g: (0, 0)),
                pl.BlockSpec((1, H2p), lambda g: (0, 0)),
            ],
            out_specs=pl.BlockSpec((GN, H2p), lambda g: (g, 0)),
        ),
        compiler_params=pltpu.CompilerParams(
            dimension_semantics=("parallel",),
            vmem_limit_bytes=vmem_limit),
        cost_estimate=pl.CostEstimate(
            flops=flops, transcendentals=0, bytes_accessed=bytes_accessed),
    )(A_wide, Xbd, W1bd, b1cat, W2cat, b2sum)

    return out[:, :H2].astype(f32).reshape(B, N, H2)


def init_params(key, in_dim, hidden1_dim, hidden2_dim):
    """Deterministic synthetic init (PyTorch-Linear-like uniform fan-in scaling)."""
    ks = jax.random.split(key, 4)
    s1 = 1.0 / jnp.sqrt(in_dim)
    s2 = 1.0 / jnp.sqrt(hidden1_dim)
    W1 = jax.random.uniform(ks[0], (4, in_dim, hidden1_dim), jnp.float32, -s1, s1)
    b1 = jax.random.uniform(ks[1], (4, 1, hidden1_dim), jnp.float32, -s1, s1)
    W2 = jax.random.uniform(ks[2], (4, hidden1_dim, hidden2_dim), jnp.float32, -s2, s2)
    b2 = jax.random.uniform(ks[3], (4, 1, hidden2_dim), jnp.float32, -s2, s2)
    return W1, b1, W2, b2


def reference_f32(x, walk_feats, hop1, hop2, hop3, params, use_rw=True):
    """Pure-JAX f32 reference matching the PyTorch module."""
    W1, b1, W2, b2 = params
    X = jnp.concatenate([x, walk_feats], axis=-1) if use_rw else x

    def mlp(k, inp):
        h = jnp.maximum(jnp.einsum("bnd,dh->bnh", inp, W1[k]) + b1[k], 0.0)
        return jnp.einsum("bnh,ho->bno", h, W2[k]) + b2[k]

    return (mlp(0, X)
            + mlp(1, jnp.einsum("bij,bjd->bid", hop1, X))
            + mlp(2, jnp.einsum("bij,bjd->bid", hop2, X))
            + mlp(3, jnp.einsum("bij,bjd->bid", hop3, X)))


def reference_bf16(x, walk_feats, hop1, hop2, hop3, params, use_rw=True):
    """Reference using the same bf16-operand / f32-accumulation numerics as the kernel."""
    W1, b1, W2, b2 = params
    bf16, f32 = jnp.bfloat16, jnp.float32
    X = (jnp.concatenate([x, walk_feats], axis=-1) if use_rw else x).astype(bf16)

    def prop(h):
        return jnp.einsum("bij,bjd->bid", h.astype(bf16), X,
                          preferred_element_type=f32).astype(bf16)

    def mlp(k, inp):
        h = jnp.maximum(
            jnp.einsum("bnd,dh->bnh", inp, W1[k].astype(bf16),
                       preferred_element_type=f32) + b1[k], 0.0).astype(bf16)
        return jnp.einsum("bnh,ho->bno", h, W2[k].astype(bf16),
                          preferred_element_type=f32) + b2[k]

    return mlp(0, X) + mlp(1, prop(hop1)) + mlp(2, prop(hop2)) + mlp(3, prop(hop3))


if __name__ == "__main__":
    key = jax.random.PRNGKey(0)
    k_x, k_w, k_h1, k_h2, k_h3, k_p = jax.random.split(key, 6)

    B = 64                # subgraphs -> grid of 4 groups x (G=16 graphs, M=G*N=256 rows)
    N = 16                # nodes per subgraph
    feat_dim = 12         # raw node feature dim
    rw_dim = 4            # random-walk feature dim
    in_dim = feat_dim + rw_dim
    hidden1_dim = 32
    hidden2_dim = 16

    x = jax.random.normal(k_x, (B, N, feat_dim), jnp.float32)
    walk_feats = jax.random.normal(k_w, (B, N, rw_dim), jnp.float32)
    hop1 = (jax.random.uniform(k_h1, (B, N, N)) < 0.3).astype(jnp.float32)
    hop2 = (jax.random.uniform(k_h2, (B, N, N)) < 0.3).astype(jnp.float32)
    hop3 = (jax.random.uniform(k_h3, (B, N, N)) < 0.3).astype(jnp.float32)

    params = init_params(k_p, in_dim, hidden1_dim, hidden2_dim)

    out = subgraph_gnn(x, walk_feats, hop1, hop2, hop3, params, use_rw=True)
    out = jax.block_until_ready(out)
    assert out.shape == (B, N, hidden2_dim)

    # Tight check against a reference with identical bf16-operand / f32-accum numerics
    # (kernel additionally rounds the stored output to bf16, covered by the tolerance).
    ref_b = reference_bf16(x, walk_feats, hop1, hop2, hop3, params)
    assert jnp.allclose(out, ref_b, atol=2e-2, rtol=2e-2), \
        float(jnp.max(jnp.abs(out - ref_b)))
    # Loose check against the full-precision module semantics.
    ref_f = reference_f32(x, walk_feats, hop1, hop2, hop3, params)
    assert jnp.allclose(out, ref_f, atol=1.5e-1, rtol=1e-1), \
        float(jnp.max(jnp.abs(out - ref_f)))

    print("KERNEL_OK")
</pallas_src>

<mosaic_0001>
module attributes {stable_mosaic.version = 11 : i64} {
  func.func @subgraph_gnn_kernel(%arg0: i32, %arg1: memref<256x1024xbf16, #tpu.memory_space<vmem>>, %arg2: memref<1024x64xbf16, #tpu.memory_space<vmem>>, %arg3: memref<64x128xbf16, #tpu.memory_space<vmem>>, %arg4: memref<1x128xf32, #tpu.memory_space<vmem>>, %arg5: memref<128x128xbf16, #tpu.memory_space<vmem>>, %arg6: memref<1x128xf32, #tpu.memory_space<vmem>>, %arg7: memref<256x128xbf16, #tpu.memory_space<vmem>>) attributes {dimension_semantics = [#tpu.dimension_semantics<parallel>], iteration_bounds = array<i64: 4>, scalar_prefetch = 0 : i64, scratch_operands = 0 : i64, tpu.core_type = #tpu.core_type<tc>, window_params = [{transform_indices = @transform_0, window_bounds = array<i64: 256, 1024>}, {transform_indices = @transform_1, window_bounds = array<i64: 1024, 64>}, {pipeline_mode = #tpu.pipeline_mode<synchronous>, transform_indices = @transform_2, window_bounds = array<i64: 64, 128>}, {pipeline_mode = #tpu.pipeline_mode<synchronous>, transform_indices = @transform_3, window_bounds = array<i64: 1, 128>}, {pipeline_mode = #tpu.pipeline_mode<synchronous>, transform_indices = @transform_4, window_bounds = array<i64: 128, 128>}, {pipeline_mode = #tpu.pipeline_mode<synchronous>, transform_indices = @transform_5, window_bounds = array<i64: 1, 128>}, {transform_indices = @transform_6, window_bounds = array<i64: 256, 128>}]} {
    %c0 = arith.constant 0 : index
    %c0_0 = arith.constant 0 : index
    %0 = vector.load %arg1[%c0, %c0_0] : memref<256x1024xbf16, #tpu.memory_space<vmem>>, vector<256x1024xbf16>
    %c0_1 = arith.constant 0 : index
    %c0_2 = arith.constant 0 : index
    %1 = vector.load %arg2[%c0_1, %c0_2] : memref<1024x64xbf16, #tpu.memory_space<vmem>>, vector<1024x64xbf16>
    %cst = arith.constant dense<0.000000e+00> : vector<256x64xf32>
    %2 = tpu.matmul %0, %1, %cst {dimension_numbers = #tpu.dot_dimension_numbers<[1], [0], [0], [1], [0, 0, 1, 1], [], []>} : vector<256x1024xbf16>, vector<1024x64xbf16>, vector<256x64xf32> -> vector<256x64xf32>
    %3 = arith.truncf %2 : vector<256x64xf32> to vector<256x64xbf16>
    %c0_3 = arith.constant 0 : index
    %c0_4 = arith.constant 0 : index
    %4 = vector.load %arg3[%c0_3, %c0_4] : memref<64x128xbf16, #tpu.memory_space<vmem>>, vector<64x128xbf16>
    %cst_5 = arith.constant dense<0.000000e+00> : vector<256x128xf32>
    %5 = tpu.matmul %3, %4, %cst_5 {dimension_numbers = #tpu.dot_dimension_numbers<[1], [0], [0], [1], [0, 0, 1, 1], [], []>} : vector<256x64xbf16>, vector<64x128xbf16>, vector<256x128xf32> -> vector<256x128xf32>
    %c0_6 = arith.constant 0 : index
    %c0_7 = arith.constant 0 : index
    %6 = vector.load %arg4[%c0_6, %c0_7] : memref<1x128xf32, #tpu.memory_space<vmem>>, vector<1x128xf32>
    %7 = vector.broadcast %6 : vector<1x128xf32> to vector<256x128xf32>
    %8 = arith.addf %5, %7 : vector<256x128xf32>
    %cst_8 = arith.constant 0.000000e+00 : f32
    %9 = vector.broadcast %cst_8 : f32 to vector<256x128xf32>
    %10 = arith.maximumf %8, %9 : vector<256x128xf32>
    %11 = arith.truncf %10 : vector<256x128xf32> to vector<256x128xbf16>
    %c0_9 = arith.constant 0 : index
    %c0_10 = arith.constant 0 : index
    %12 = vector.load %arg5[%c0_9, %c0_10] : memref<128x128xbf16, #tpu.memory_space<vmem>>, vector<128x128xbf16>
    %cst_11 = arith.constant dense<0.000000e+00> : vector<256x128xf32>
    %13 = tpu.matmul %11, %12, %cst_11 {dimension_numbers = #tpu.dot_dimension_numbers<[1], [0], [0], [1], [0, 0, 1, 1], [], []>} : vector<256x128xbf16>, vector<128x128xbf16>, vector<256x128xf32> -> vector<256x128xf32>
    %c0_12 = arith.constant 0 : index
    %c0_13 = arith.constant 0 : index
    %14 = vector.load %arg6[%c0_12, %c0_13] : memref<1x128xf32, #tpu.memory_space<vmem>>, vector<1x128xf32>
    %15 = vector.broadcast %14 : vector<1x128xf32> to vector<256x128xf32>
    %16 = arith.addf %13, %15 : vector<256x128xf32>
    %17 = arith.truncf %16 : vector<256x128xf32> to vector<256x128xbf16>
    %c0_14 = arith.constant 0 : index
    %c0_15 = arith.constant 0 : index
    %18 = vector.load %arg7[%c0_14, %c0_15] : memref<256x128xbf16, #tpu.memory_space<vmem>>, vector<256x128xbf16>
    tpu.vector_store %arg7[%c0_14, %c0_15], %17 {strides = array<i32>} : memref<256x128xbf16, #tpu.memory_space<vmem>>, vector<256x128xbf16>,
    return
  }
  func.func @transform_0(%arg0: i32) -> (i32, i32) {
    %c0_i32 = arith.constant 0 : i32
    %c0_i32_0 = arith.constant 0 : i32
    return %arg0, %c0_i32 : i32, i32
  }
  func.func @transform_1(%arg0: i32) -> (i32, i32) {
    %c0_i32 = arith.constant 0 : i32
    %c0_i32_0 = arith.constant 0 : i32
    return %arg0, %c0_i32 : i32, i32
  }
  func.func @transform_2(%arg0: i32) -> (i32, i32) {
    %c0_i32 = arith.constant 0 : i32
    %c0_i32_0 = arith.constant 0 : i32
    %c0_i32_1 = arith.constant 0 : i32
    return %c0_i32, %c0_i32_0 : i32, i32
  }
  func.func @transform_3(%arg0: i32) -> (i32, i32) {
    %c0_i32 = arith.constant 0 : i32
    %c0_i32_0 = arith.constant 0 : i32
    %c0_i32_1 = arith.constant 0 : i32
    return %c0_i32, %c0_i32_0 : i32, i32
  }
  func.func @transform_4(%arg0: i32) -> (i32, i32) {
    %c0_i32 = arith.constant 0 : i32
    %c0_i32_0 = arith.constant 0 : i32
    %c0_i32_1 = arith.constant 0 : i32
    return %c0_i32, %c0_i32_0 : i32, i32
  }
  func.func @transform_5(%arg0: i32) -> (i32, i32) {
    %c0_i32 = arith.constant 0 : i32
    %c0_i32_0 = arith.constant 0 : i32
    %c0_i32_1 = arith.constant 0 : i32
    return %c0_i32, %c0_i32_0 : i32, i32
  }
  func.func @transform_6(%arg0: i32) -> (i32, i32) {
    %c0_i32 = arith.constant 0 : i32
    %c0_i32_0 = arith.constant 0 : i32
    return %arg0, %c0_i32 : i32, i32
  }
}

</mosaic_0001>

<llo_original>
// kernel: tpu_custom_call.1
$region0: #{tpu_custom_call.1}
  #allocation0 [shape = 'u32[]', space=smem, size = 0x4, offset = 0x4, fixed_abs, tag = 'smem constant byte address 0x4 - core index']
  #allocation1 [shape = 'u32[144,128]{1,0:T(1,128)}', space=vmem, size = 0x12000, scoped, tag = 'internal scratch']
  %s0 = inlined_call_operand.hbm [shape: bf16[1024,1024], index: 0, kind: input, shape index: {}]
  %s1 = inlined_call_operand.vmem [shape: bf16[4096,64], index: 1, kind: input, shape index: {}]
  %s2 = inlined_call_operand.hbm [shape: bf16[64,128], index: 2, kind: input, shape index: {}]
  %s3 = inlined_call_operand.hbm [shape: f32[1,128], index: 3, kind: input, shape index: {}]
  %s4 = inlined_call_operand.hbm [shape: bf16[128,128], index: 4, kind: input, shape index: {}]
  %s5 = inlined_call_operand.hbm [shape: f32[1,128], index: 5, kind: input, shape index: {}]
  %s6 = inlined_call_operand.hbm [shape: bf16[1024,128], index: 6, kind: output, shape index: {}]
  %s7 = sld [smem:[#allocation0]]
  $region77: #{tpu_custom_call.1} parent=0
    _
  %s9 = ssub.s32 1, %s7
  %s10 = scalar_select 0, %s9, %s7
  $region1: #{tpu_custom_call.1} parent=0
    #allocation2 [shape = 'u8[1048576]{0}', space=vmem, size = 0x100000, scoped, tag = 'input window, operand 0']
    #allocation3 [shape = 's32[2]{0}', space=sflag, size = 0x8, scoped, tag = 'scoped memory for tpu_custom_call.1']
    #allocation4 [shape = 's32[2]{0}', space=sflag, size = 0x8, scoped, tag = 'scoped memory for tpu_custom_call.1']
    #allocation5 [shape = 'u8[16384]{0}', space=vmem, size = 0x4000, scoped, tag = 'input window, operand 2, single buffered']
    #allocation6 [shape = 's32[1]{0}', space=sflag, size = 0x4, scoped, tag = 'scoped memory for tpu_custom_call.1']
    #allocation7 [shape = 'u8[512]{0}', space=vmem, size = 0x400, scoped, tag = 'input window, operand 3, single buffered']
    #allocation8 [shape = 'u8[32768]{0}', space=vmem, size = 0x8000, scoped, tag = 'input window, operand 4, single buffered']
    #allocation9 [shape = 's32[1]{0}', space=sflag, size = 0x4, scoped, tag = 'scoped memory for tpu_custom_call.1']
    #allocation10 [shape = 'u8[512]{0}', space=vmem, size = 0x400, scoped, tag = 'input window, operand 5, single buffered']
    #allocation11 [shape = 'u8[131072]{0}', space=vmem, size = 0x20000, scoped, tag = 'output window, operand 0']
    %11 = vsyncpa [#allocation3], 0
    %s12 = scalar_lea.sflag [#allocation3], 1
    %13 = vsyncpa %s12, 0
    %14 = vsyncpa [#allocation6], 0
    %15 = vsyncpa [#allocation9], 0
    %16 = vsyncpa [#allocation4], 0
    %s17 = scalar_lea.sflag [#allocation4], 1
    %18 = vsyncpa %s17, 0
    loop: start=0, step=1, limit=6
    $region2: #{tpu_custom_call.1} parent=1 // loop_pre_header
      _
    $region3: #{tpu_custom_call.1} parent=1 // loop_header
      %s20 = sphi 0, %s24
      %p21 = scmp.ge.s32.totalorder %s20, 6
      %s30 = sphi 0, %s32
      %s33 = sphi 0, %s30
      %s34 = sphi 0, %s33
      %s50 = sphi 0, %s34
      %s56 = sphi 0, %s58
      %s59 = sphi 0, %s56
      %s60 = sphi 0, %s59
      %s76 = sphi 0, %s60
      %s80 = sphi 0, %s80
      %s82 = sphi 0, %s80
      %s83 = sphi 0, %s82
      %s97 = sphi 0, %s83
      %s101 = sphi 0, %s101
      %s103 = sphi 0, %s101
      %s104 = sphi 0, %s103
      %s118 = sphi 0, %s104
      %s122 = sphi 0, %s122
      %s124 = sphi 0, %s122
      %s125 = sphi 0, %s124
      %s139 = sphi 0, %s125
      %s143 = sphi 0, %s143
      %s145 = sphi 0, %s143
      %s146 = sphi 0, %s145
      %s160 = sphi 0, %s146
      %s166 = sphi 0, %s168
      %s169 = sphi 0, %s166
      %s170 = sphi 0, %s169
      %s186 = sphi 0, %s170
    $region4: #{tpu_custom_call.1} parent=1 // loop_header_branch
      %23 = sbr.rel (%p21) target = $region8
    $region5: #{tpu_custom_call.1} parent=1 // loop_body
      %s25 = ssub.s32 %s20, 1
      %s26 = ssub.s32 %s20, 2
      %s27 = sadd.s32 %s20, 1
      %s28 = ssub.s32 %s20, %s27
      %p29 = scmp.eq.s32.totalorder %s28, 0
      %s31 = sadd.s32 %s30, 1
      %s32 = scalar_select %p29, %s30, %s31
      %p35 = pneg %p29
      %p36 = scmp.eq.s32.totalorder %s20, 3
      %p37 = por %p35, %p36
      %p38 = scmp.ne.s32.totalorder %s30, %s33
      %p39 = scmp.eq.s32.totalorder %s20, 0
      %p40 = por %p38, %p39
      %p41 = scmp.ne.s32.totalorder %s30, %s33
      %p42 = scmp.eq.s32.totalorder %s25, 3
      %p43 = por %p41, %p42
      %p44 = scmp.ne.s32.totalorder %s33, %s34
      %p45 = scmp.eq.s32.totalorder %s25, 0
      %p46 = por %p44, %p45
      %p47 = scmp.ne.s32.totalorder %s33, %s34
      %p48 = scmp.eq.s32.totalorder %s26, 3
      %p49 = por %p47, %p48
      %p51 = scmp.ne.s32.totalorder %s34, %s50
      %p52 = scmp.eq.s32.totalorder %s26, 0
      %p53 = por %p51, %p52
      %s54 = ssub.s32 %s20, %s27
      %p55 = scmp.eq.s32.totalorder %s54, 0
      %s57 = sadd.s32 %s56, 1
      %s58 = scalar_select %p55, %s56, %s57
      %p61 = pneg %p55
      %p62 = scmp.eq.s32.totalorder %s20, 3
      %p63 = por %p61, %p62
      %p64 = scmp.ne.s32.totalorder %s56, %s59
      %p65 = scmp.eq.s32.totalorder %s20, 0
      %p66 = por %p64, %p65
      %p67 = scmp.ne.s32.totalorder %s56, %s59
      %p68 = scmp.eq.s32.totalorder %s25, 3
      %p69 = por %p67, %p68
      %p70 = scmp.ne.s32.totalorder %s59, %s60
      %p71 = scmp.eq.s32.totalorder %s25, 0
      %p72 = por %p70, %p71
      %p73 = scmp.ne.s32.totalorder %s59, %s60
      %p74 = scmp.eq.s32.totalorder %s26, 3
      %p75 = por %p73, %p74
      %p77 = scmp.ne.s32.totalorder %s60, %s76
      %p78 = scmp.eq.s32.totalorder %s26, 0
      %p79 = por %p77, %p78
      %s81 = sadd.s32 %s80, 1
      %p84 = scmp.eq.s32.totalorder %s20, 3
      %p85 = scmp.ne.s32.totalorder %s80, %s82
      %p86 = scmp.eq.s32.totalorder %s20, 0
      %p87 = por %p85, %p86
      %p88 = scmp.ne.s32.totalorder %s80, %s82
      %p89 = scmp.eq.s32.totalorder %s25, 3
      %p90 = por %p88, %p89
      %p91 = scmp.ne.s32.totalorder %s82, %s83
      %p92 = scmp.eq.s32.totalorder %s25, 0
      %p93 = por %p91, %p92
      %p94 = scmp.ne.s32.totalorder %s82, %s83
      %p95 = scmp.eq.s32.totalorder %s26, 3
      %p96 = por %p94, %p95
      %p98 = scmp.ne.s32.totalorder %s83, %s97
      %p99 = scmp.eq.s32.totalorder %s26, 0
      %p100 = por %p98, %p99
      %s102 = sadd.s32 %s101, 1
      %p105 = scmp.eq.s32.totalorder %s20, 3
      %p106 = scmp.ne.s32.totalorder %s101, %s103
      %p107 = scmp.eq.s32.totalorder %s20, 0
      %p108 = por %p106, %p107
      %p109 = scmp.ne.s32.totalorder %s101, %s103
      %p110 = scmp.eq.s32.totalorder %s25, 3
      %p111 = por %p109, %p110
      %p112 = scmp.ne.s32.totalorder %s103, %s104
      %p113 = scmp.eq.s32.totalorder %s25, 0
      %p114 = por %p112, %p113
      %p115 = scmp.ne.s32.totalorder %s103, %s104
      %p116 = scmp.eq.s32.totalorder %s26, 3
      %p117 = por %p115, %p116
      %p119 = scmp.ne.s32.totalorder %s104, %s118
      %p120 = scmp.eq.s32.totalorder %s26, 0
      %p121 = por %p119, %p120
      %s123 = sadd.s32 %s122, 1
      %p126 = scmp.eq.s32.totalorder %s20, 3
      %p127 = scmp.ne.s32.totalorder %s122, %s124
      %p128 = scmp.eq.s32.totalorder %s20, 0
      %p129 = por %p127, %p128
      %p130 = scmp.ne.s32.totalorder %s122, %s124
      %p131 = scmp.eq.s32.totalorder %s25, 3
      %p132 = por %p130, %p131
      %p133 = scmp.ne.s32.totalorder %s124, %s125
      %p134 = scmp.eq.s32.totalorder %s25, 0
      %p135 = por %p133, %p134
      %p136 = scmp.ne.s32.totalorder %s124, %s125
      %p137 = scmp.eq.s32.totalorder %s26, 3
      %p138 = por %p136, %p137
      %p140 = scmp.ne.s32.totalorder %s125, %s139
      %p141 = scmp.eq.s32.totalorder %s26, 0
      %p142 = por %p140, %p141
      %s144 = sadd.s32 %s143, 1
      %p147 = scmp.eq.s32.totalorder %s20, 3
      %p148 = scmp.ne.s32.totalorder %s143, %s145
      %p149 = scmp.eq.s32.totalorder %s20, 0
      %p150 = por %p148, %p149
      %p151 = scmp.ne.s32.totalorder %s143, %s145
      %p152 = scmp.eq.s32.totalorder %s25, 3
      %p153 = por %p151, %p152
      %p154 = scmp.ne.s32.totalorder %s145, %s146
      %p155 = scmp.eq.s32.totalorder %s25, 0
      %p156 = por %p154, %p155
      %p157 = scmp.ne.s32.totalorder %s145, %s146
      %p158 = scmp.eq.s32.totalorder %s26, 3
      %p159 = por %p157, %p158
      %p161 = scmp.ne.s32.totalorder %s146, %s160
      %p162 = scmp.eq.s32.totalorder %s26, 0
      %p163 = por %p161, %p162
      %s164 = ssub.s32 %s20, %s27
      %p165 = scmp.eq.s32.totalorder %s164, 0
      %s167 = sadd.s32 %s166, 1
      %s168 = scalar_select %p165, %s166, %s167
      %p171 = pneg %p165
      %p172 = scmp.eq.s32.totalorder %s20, 3
      %p173 = por %p171, %p172
      %p174 = scmp.ne.s32.totalorder %s166, %s169
      %p175 = scmp.eq.s32.totalorder %s20, 0
      %p176 = por %p174, %p175
      %p177 = scmp.ne.s32.totalorder %s166, %s169
      %p178 = scmp.eq.s32.totalorder %s25, 3
      %p179 = por %p177, %p178
      %p180 = scmp.ne.s32.totalorder %s169, %s170
      %p181 = scmp.eq.s32.totalorder %s25, 0
      %p182 = por %p180, %p181
      %p183 = scmp.ne.s32.totalorder %s169, %s170
      %p184 = scmp.eq.s32.totalorder %s26, 3
      %p185 = por %p183, %p184
      %p187 = scmp.ne.s32.totalorder %s170, %s186
      %p188 = scmp.eq.s32.totalorder %s26, 0
      %p189 = por %p187, %p188
      %p190 = scmp.le.s32.totalorder 1, %s20
      %p191 = scmp.lt.s32.totalorder %s20, 5
      %p192 = pnand %p190, %p191
      %p193 = pneg %p192
      // Predicated region
      $region9: #{tpu_custom_call.1} parent=5 // pred_check
        _
      $region10: #{tpu_custom_call.1} parent=5 // pred_check_branch
        %195 = sbr.rel (%p192) target = $region12
      $region11: #{tpu_custom_call.1} parent=5 // pred_region
        %s196 = ssub.s32 %s20, 1
        // Predicated region
        $region13: #{tpu_custom_call.1} parent=11 // pred_check
          %p197 = pneg %p93
        $region14: #{tpu_custom_call.1} parent=11 // pred_check_branch
          %199 = sbr.rel (%p197) target = $region16
        $region15: #{tpu_custom_call.1} parent=11 // pred_region
          %s201 = ssub.s32 512, 512
          %202 = vsyncadd [#allocation6], %s201
          %s203 = sshll.u32 [#allocation5], 4
          %s204 = int_to_ptr.vmem [resolvable:$true] %s203
          %209 = dma.hbm_to_vmem [thread:$0]  %s2, 512, %s204, [#allocation6], 64, 64, 4
        $region16: #{tpu_custom_call.1} parent=11 // pred_fallthru
          _
        // Predicated region
        $region17: #{tpu_custom_call.1} parent=11 // pred_check
          %p210 = pneg %p114
        $region18: #{tpu_custom_call.1} parent=11 // pred_check_branch
          %212 = sbr.rel (%p210) target = $region20
        $region19: #{tpu_custom_call.1} parent=11 // pred_region
          %s214 = ssub.s32 16, 16
          %215 = vsyncadd [#allocation6], %s214
          %s217 = sshll.u32 [#allocation7], 4
          %s218 = int_to_ptr.vmem [resolvable:$true] %s217
          %220 = dma.hbm_to_vmem [thread:$0]  %s3, 16, %s218, [#allocation6]
        $region20: #{tpu_custom_call.1} parent=11 // pred_fallthru
          _
        // Predicated region
        $region21: #{tpu_custom_call.1} parent=11 // pred_check
          %p221 = pneg %p135
        $region22: #{tpu_custom_call.1} parent=11 // pred_check_branch
          %223 = sbr.rel (%p221) target = $region24
        $region23: #{tpu_custom_call.1} parent=11 // pred_region
          %s225 = ssub.s32 1024, 1024
          %226 = vsyncadd [#allocation9], %s225
          %s227 = sshll.u32 [#allocation8], 4
          %s228 = int_to_ptr.vmem [resolvable:$true] %s227
          %233 = dma.hbm_to_vmem [thread:$0]  %s4, 1024, %s228, [#allocation9], 64, 64, 4
        $region24: #{tpu_custom_call.1} parent=11 // pred_fallthru
          _
        // Predicated region
        $region25: #{tpu_custom_call.1} parent=11 // pred_check
          %p234 = pneg %p156
        $region26: #{tpu_custom_call.1} parent=11 // pred_check_branch
          %236 = sbr.rel (%p234) target = $region28
        $region27: #{tpu_custom_call.1} parent=11 // pred_region
          %s238 = ssub.s32 16, 16
          %239 = vsyncadd [#allocation9], %s238
          %s241 = sshll.u32 [#allocation10], 4
          %s242 = int_to_ptr.vmem [resolvable:$true] %s241
          %244 = dma.hbm_to_vmem [thread:$0]  %s5, 16, %s242, [#allocation9]
        $region28: #{tpu_custom_call.1} parent=11 // pred_fallthru
          _
      $region12: #{tpu_custom_call.1} parent=5 // pred_fallthru
        _
      %p245 = scmp.lt.s32.totalorder %s20, 4
      // Predicated region
      $region29: #{tpu_custom_call.1} parent=5 // pred_check
        %p246 = pneg %p245
      $region30: #{tpu_custom_call.1} parent=5 // pred_check_branch
        %248 = sbr.rel (%p246) target = $region32
      $region31: #{tpu_custom_call.1} parent=5 // pred_region
        // Predicated region
        $region33: #{tpu_custom_call.1} parent=31 // pred_check
          %p249 = pneg %p40
        $region34: #{tpu_custom_call.1} parent=31 // pred_check_branch
          %251 = sbr.rel (%p249) target = $region36
        $region35: #{tpu_custom_call.1} parent=31 // pred_region
          %s252 = sand.u32 %s30, 1
          %s253 = scalar_lea.sflag [#allocation3], %s252
          %s254 = sand.u32 %s30, 1
          %s255 = smul.addr %s254, 1024
          %s256 = scalar_lea.vmem [#allocation2], %s255
          %s257 = smul.u32 32, %s20
          %s259 = ssub.s32 16384, 16384
          %260 = vsyncadd %s253, %s259
          %s261 = smul.addr %s257, 8
          %s262 = smul.addr %s261, 64
          %s263 = scalar_lea.hbm %s0, %s262
          %s264 = sshll.u32 %s256, 4
          %s265 = int_to_ptr.vmem [resolvable:$true] %s264
          %270 = dma.hbm_to_vmem [thread:$0]  %s263, 16384, %s265, %s253, 512, 512, 32
        $region36: #{tpu_custom_call.1} parent=31 // pred_fallthru
          _
        // Predicated region
        $region37: #{tpu_custom_call.1} parent=31 // pred_check
          %p271 = pneg %p66
        $region38: #{tpu_custom_call.1} parent=31 // pred_check_branch
          %273 = sbr.rel (%p271) target = $region40
        $region39: #{tpu_custom_call.1} parent=31 // pred_region
          %s274 = smul.u32 128, %s20
          %p275 = scmp.lt.s32.totalorder %s274, 511
          %s276 = scalar_select %p275, %s274, 511
          %s277 = smul.addr %s276, 4
          %s278 = scalar_lea.vmem %s1, %s277
          %s279 = smul.u32 128, %s20
        $region40: #{tpu_custom_call.1} parent=31 // pred_fallthru
          _
      $region32: #{tpu_custom_call.1} parent=5 // pred_fallthru
        _
      %p280 = scmp.le.s32.totalorder 1, %s20
      %p281 = scmp.lt.s32.totalorder %s20, 5
      %p282 = pnand %p280, %p281
      %p283 = pneg %p282
      // Predicated region
      $region41: #{tpu_custom_call.1} parent=5 // pred_check
        _
      $region42: #{tpu_custom_call.1} parent=5 // pred_check_branch
        %285 = sbr.rel (%p282) target = $region44
      $region43: #{tpu_custom_call.1} parent=5 // pred_region
        %s286 = ssub.s32 %s20, 1
        %s287 = sand.u32 %s33, 1
        %s288 = scalar_lea.sflag [#allocation3], %s287
        %s289 = sand.u32 %s33, 1
        %s290 = smul.addr %s289, 1024
        %s291 = scalar_lea.vmem [#allocation2], %s290
        // Predicated region
        $region45: #{tpu_custom_call.1} parent=43 // pred_check
          %p292 = pneg %p46
        $region46: #{tpu_custom_call.1} parent=43 // pred_check_branch
          %294 = sbr.rel (%p292) target = $region48
        $region47: #{tpu_custom_call.1} parent=43 // pred_region
          %295 = dma.done %s288, 16384
        $region48: #{tpu_custom_call.1} parent=43 // pred_fallthru
          _
        // Predicated region
        $region49: #{tpu_custom_call.1} parent=43 // pred_check
          %p296 = pneg %p93
        $region50: #{tpu_custom_call.1} parent=43 // pred_check_branch
          %298 = sbr.rel (%p296) target = $region52
        $region51: #{tpu_custom_call.1} parent=43 // pred_region
          %299 = dma.done [#allocation6], 512
        $region52: #{tpu_custom_call.1} parent=43 // pred_fallthru
          _
        // Predicated region
        $region53: #{tpu_custom_call.1} parent=43 // pred_check
          %p300 = pneg %p114
        $region54: #{tpu_custom_call.1} parent=43 // pred_check_branch
          %302 = sbr.rel (%p300) target = $region56
        $region55: #{tpu_custom_call.1} parent=43 // pred_region
          %303 = dma.done [#allocation6], 16
        $region56: #{tpu_custom_call.1} parent=43 // pred_fallthru
          _
        // Predicated region
        $region57: #{tpu_custom_call.1} parent=43 // pred_check
          %p304 = pneg %p135
        $region58: #{tpu_custom_call.1} parent=43 // pred_check_branch
          %306 = sbr.rel (%p304) target = $region60
        $region59: #{tpu_custom_call.1} parent=43 // pred_region
          %307 = dma.done [#allocation9], 1024
        $region60: #{tpu_custom_call.1} parent=43 // pred_fallthru
          _
        // Predicated region
        $region61: #{tpu_custom_call.1} parent=43 // pred_check
          %p308 = pneg %p156
        $region62: #{tpu_custom_call.1} parent=43 // pred_check_branch
          %310 = sbr.rel (%p308) target = $region64
        $region63: #{tpu_custom_call.1} parent=43 // pred_region
          %311 = dma.done [#allocation9], 16
        $region64: #{tpu_custom_call.1} parent=43 // pred_fallthru
          _
        %s312 = sand.u32 %s33, 1
        %s313 = scalar_lea.sflag [#allocation3], %s312
        %s314 = sand.u32 %s33, 1
        %s315 = smul.addr %s314, 1024
        %s316 = scalar_lea.vmem [#allocation2], %s315
        %p317 = pneg %p46
        %p318 = pneg %p43
        %s319 = smul.u32 128, %s25
        %p320 = scmp.lt.s32.totalorder %s319, 511
        %s321 = scalar_select %p320, %s319, 511
        %s322 = smul.addr %s321, 4
        %s323 = scalar_lea.vmem %s1, %s322
        %p324 = pneg %p72
        %p325 = pneg %p69
        %p326 = pneg %p93
        %p327 = pneg %p90
        %p328 = pneg %p114
        %p329 = pneg %p111
        %p330 = pneg %p135
        %p331 = pneg %p132
        %p332 = pneg %p156
        %p333 = pneg %p153
        %p334 = pneg %p182
        %p335 = pneg %p179
        %s336 = sand.u32 %s169, 1
        %s337 = scalar_lea.sflag [#allocation4], %s336
        %s338 = sand.u32 %s169, 1
        %s339 = smul.addr %s338, 128
        %s340 = scalar_lea.vmem [#allocation11], %s339
        %s341 = smul.u32 32, %s25
        %s342 = smul.u32 128, %s25
        %p343 = scmp.lt.s32.totalorder %s342, 511
        %s344 = scalar_select %p343, %s342, 511
        %s345 = smul.addr %s344, 4
        %s346 = scalar_lea.vmem %s1, %s345
        %s347 = smul.u32 128, %s25
        %s348 = smul.u32 32, %s25
        %v350 = vld [vmem:[%s291] sm:$0xff]
        %v351 = vld [vmem:[%s291 + $0x8] sm:$0xff]
        %v352 = vld [vmem:[%s291 + $0x10] sm:$0xff]
        %v353 = vld [vmem:[%s291 + $0x18] sm:$0xff]
        %v354 = vld [vmem:[%s291 + $0x20] sm:$0xff]
        %v355 = vld [vmem:[%s291 + $0x28] sm:$0xff]
        %v356 = vld [vmem:[%s291 + $0x30] sm:$0xff]
        %v357 = vld [vmem:[%s291 + $0x38] sm:$0xff]
        %v358 = vld [vmem:[%s291 + $0x40] sm:$0xff]
        %v359 = vld [vmem:[%s291 + $0x48] sm:$0xff]
        %v360 = vld [vmem:[%s291 + $0x50] sm:$0xff]
        %v361 = vld [vmem:[%s291 + $0x58] sm:$0xff]
        %v362 = vld [vmem:[%s291 + $0x60] sm:$0xff]
        %v363 = vld [vmem:[%s291 + $0x68] sm:$0xff]
        %v364 = vld [vmem:[%s291 + $0x70] sm:$0xff]
        %v365 = vld [vmem:[%s291 + $0x78] sm:$0xff]
        %v366 = vld [vmem:[%s291 + $0x80] sm:$0xff]
        %v367 = vld [vmem:[%s291 + $0x88] sm:$0xff]
        %v368 = vld [vmem:[%s291 + $0x90] sm:$0xff]
        %v369 = vld [vmem:[%s291 + $0x98] sm:$0xff]
        %v370 = vld [vmem:[%s291 + $0xa0] sm:$0xff]
        %v371 = vld [vmem:[%s291 + $0xa8] sm:$0xff]
        %v372 = vld [vmem:[%s291 + $0xb0] sm:$0xff]
        %v373 = vld [vmem:[%s291 + $0xb8] sm:$0xff]
        %v374 = vld [vmem:[%s291 + $0xc0] sm:$0xff]
        %v375 = vld [vmem:[%s291 + $0xc8] sm:$0xff]
        %v376 = vld [vmem:[%s291 + $0xd0] sm:$0xff]
        %v377 = vld [vmem:[%s291 + $0xd8] sm:$0xff]
        %v378 = vld [vmem:[%s291 + $0xe0] sm:$0xff]
        %v379 = vld [vmem:[%s291 + $0xe8] sm:$0xff]
        %v380 = vld [vmem:[%s291 + $0xf0] sm:$0xff]
        %v381 = vld [vmem:[%s291 + $0xf8] sm:$0xff]
        %v382 = vld [vmem:[%s291 + $0x100] sm:$0xff]
        %v383 = vld [vmem:[%s291 + $0x108] sm:$0xff]
        %v384 = vld [vmem:[%s291 + $0x110] sm:$0xff]
        %v385 = vld [vmem:[%s291 + $0x118] sm:$0xff]
        %v386 = vld [vmem:[%s291 + $0x120] sm:$0xff]
        %v387 = vld [vmem:[%s291 + $0x128] sm:$0xff]
        %v388 = vld [vmem:[%s291 + $0x130] sm:$0xff]
        %v389 = vld [vmem:[%s291 + $0x138] sm:$0xff]
        %v390 = vld [vmem:[%s291 + $0x140] sm:$0xff]
        %v391 = vld [vmem:[%s291 + $0x148] sm:$0xff]
        %v392 = vld [vmem:[%s291 + $0x150] sm:$0xff]
        %v393 = vld [vmem:[%s291 + $0x158] sm:$0xff]
        %v394 = vld [vmem:[%s291 + $0x160] sm:$0xff]
        %v395 = vld [vmem:[%s291 + $0x168] sm:$0xff]
        %v396 = vld [vmem:[%s291 + $0x170] sm:$0xff]
        %v397 = vld [vmem:[%s291 + $0x178] sm:$0xff]
        %v398 = vld [vmem:[%s291 + $0x180] sm:$0xff]
        %v399 = vld [vmem:[%s291 + $0x188] sm:$0xff]
        %v400 = vld [vmem:[%s291 + $0x190] sm:$0xff]
        %v401 = vld [vmem:[%s291 + $0x198] sm:$0xff]
        %v402 = vld [vmem:[%s291 + $0x1a0] sm:$0xff]
        %v403 = vld [vmem:[%s291 + $0x1a8] sm:$0xff]
        %v404 = vld [vmem:[%s291 + $0x1b0] sm:$0xff]
        %v405 = vld [vmem:[%s291 + $0x1b8] sm:$0xff]
        %v406 = vld [vmem:[%s291 + $0x1c0] sm:$0xff]
        %v407 = vld [vmem:[%s291 + $0x1c8] sm:$0xff]
        %v408 = vld [vmem:[%s291 + $0x1d0] sm:$0xff]
        %v409 = vld [vmem:[%s291 + $0x1d8] sm:$0xff]
        %v410 = vld [vmem:[%s291 + $0x1e0] sm:$0xff]
        %v411 = vld [vmem:[%s291 + $0x1e8] sm:$0xff]
        %v412 = vld [vmem:[%s291 + $0x1f0] sm:$0xff]
        %v413 = vld [vmem:[%s291 + $0x1f8] sm:$0xff]
        %v414 = vld [vmem:[%s291 + $0x200] sm:$0xff]
        %v415 = vld [vmem:[%s291 + $0x208] sm:$0xff]
        %v416 = vld [vmem:[%s291 + $0x210] sm:$0xff]
        %v417 = vld [vmem:[%s291 + $0x218] sm:$0xff]
        %v418 = vld [vmem:[%s291 + $0x220] sm:$0xff]
        %v419 = vld [vmem:[%s291 + $0x228] sm:$0xff]
        %v420 = vld [vmem:[%s291 + $0x230] sm:$0xff]
        %v421 = vld [vmem:[%s291 + $0x238] sm:$0xff]
        %v422 = vld [vmem:[%s291 + $0x240] sm:$0xff]
        %v423 = vld [vmem:[%s291 + $0x248] sm:$0xff]
        %v424 = vld [vmem:[%s291 + $0x250] sm:$0xff]
        %v425 = vld [vmem:[%s291 + $0x258] sm:$0xff]
        %v426 = vld [vmem:[%s291 + $0x260] sm:$0xff]
        %v427 = vld [vmem:[%s291 + $0x268] sm:$0xff]
        %v428 = vld [vmem:[%s291 + $0x270] sm:$0xff]
        %v429 = vld [vmem:[%s291 + $0x278] sm:$0xff]
        %v430 = vld [vmem:[%s291 + $0x280] sm:$0xff]
        %v431 = vld [vmem:[%s291 + $0x288] sm:$0xff]
        %v432 = vld [vmem:[%s291 + $0x290] sm:$0xff]
        %v433 = vld [vmem:[%s291 + $0x298] sm:$0xff]
        %v434 = vld [vmem:[%s291 + $0x2a0] sm:$0xff]
        %v435 = vld [vmem:[%s291 + $0x2a8] sm:$0xff]
        %v436 = vld [vmem:[%s291 + $0x2b0] sm:$0xff]
        %v437 = vld [vmem:[%s291 + $0x2b8] sm:$0xff]
        %v438 = vld [vmem:[%s291 + $0x2c0] sm:$0xff]
        %v439 = vld [vmem:[%s291 + $0x2c8] sm:$0xff]
        %v440 = vld [vmem:[%s291 + $0x2d0] sm:$0xff]
        %v441 = vld [vmem:[%s291 + $0x2d8] sm:$0xff]
        %v442 = vld [vmem:[%s291 + $0x2e0] sm:$0xff]
        %v443 = vld [vmem:[%s291 + $0x2e8] sm:$0xff]
        %v444 = vld [vmem:[%s291 + $0x2f0] sm:$0xff]
        %v445 = vld [vmem:[%s291 + $0x2f8] sm:$0xff]
        %v446 = vld [vmem:[%s291 + $0x300] sm:$0xff]
        %v447 = vld [vmem:[%s291 + $0x308] sm:$0xff]
        %v448 = vld [vmem:[%s291 + $0x310] sm:$0xff]
        %v449 = vld [vmem:[%s291 + $0x318] sm:$0xff]
        %v450 = vld [vmem:[%s291 + $0x320] sm:$0xff]
        %v451 = vld [vmem:[%s291 + $0x328] sm:$0xff]
        %v452 = vld [vmem:[%s291 + $0x330] sm:$0xff]
        %v453 = vld [vmem:[%s291 + $0x338] sm:$0xff]
        %v454 = vld [vmem:[%s291 + $0x340] sm:$0xff]
        %v455 = vld [vmem:[%s291 + $0x348] sm:$0xff]
        %v456 = vld [vmem:[%s291 + $0x350] sm:$0xff]
        %v457 = vld [vmem:[%s291 + $0x358] sm:$0xff]
        %v458 = vld [vmem:[%s291 + $0x360] sm:$0xff]
        %v459 = vld [vmem:[%s291 + $0x368] sm:$0xff]
        %v460 = vld [vmem:[%s291 + $0x370] sm:$0xff]
        %v461 = vld [vmem:[%s291 + $0x378] sm:$0xff]
        %v462 = vld [vmem:[%s291 + $0x380] sm:$0xff]
        %v463 = vld [vmem:[%s291 + $0x388] sm:$0xff]
        %v464 = vld [vmem:[%s291 + $0x390] sm:$0xff]
        %v465 = vld [vmem:[%s291 + $0x398] sm:$0xff]
        %v466 = vld [vmem:[%s291 + $0x3a0] sm:$0xff]
        %v467 = vld [vmem:[%s291 + $0x3a8] sm:$0xff]
        %v468 = vld [vmem:[%s291 + $0x3b0] sm:$0xff]
        %v469 = vld [vmem:[%s291 + $0x3b8] sm:$0xff]
        %v470 = vld [vmem:[%s291 + $0x3c0] sm:$0xff]
        %v471 = vld [vmem:[%s291 + $0x3c8] sm:$0xff]
        %v472 = vld [vmem:[%s291 + $0x3d0] sm:$0xff]
        %v473 = vld [vmem:[%s291 + $0x3d8] sm:$0xff]
        %v474 = vld [vmem:[%s291 + $0x3e0] sm:$0xff]
        %v475 = vld [vmem:[%s291 + $0x3e8] sm:$0xff]
        %v476 = vld [vmem:[%s291 + $0x3f0] sm:$0xff]
        %v477 = vld [vmem:[%s291 + $0x3f8] sm:$0xff]
        %v478 = vld [vmem:[%s346] sm:$0xf]
        %v479 = vld [vmem:[%s346 + $0x4] sm:$0xf]
        %v480 = vld [vmem:[%s346 + $0x8] sm:$0xf]
        %v481 = vld [vmem:[%s346 + $0xc] sm:$0xf]
        %v482 = vld [vmem:[%s346 + $0x10] sm:$0xf]
        %v483 = vld [vmem:[%s346 + $0x14] sm:$0xf]
        %v484 = vld [vmem:[%s346 + $0x18] sm:$0xf]
        %v485 = vld [vmem:[%s346 + $0x1c] sm:$0xf]
        %v486 = vld [vmem:[%s346 + $0x20] sm:$0xf]
        %v487 = vld [vmem:[%s346 + $0x24] sm:$0xf]
        %v488 = vld [vmem:[%s346 + $0x28] sm:$0xf]
        %v489 = vld [vmem:[%s346 + $0x2c] sm:$0xf]
        %v490 = vld [vmem:[%s346 + $0x30] sm:$0xf]
        %v491 = vld [vmem:[%s346 + $0x34] sm:$0xf]
        %v492 = vld [vmem:[%s346 + $0x38] sm:$0xf]
        %v493 = vld [vmem:[%s346 + $0x3c] sm:$0xf]
        %v494 = vld [vmem:[%s346 + $0x40] sm:$0xf]
        %v495 = vld [vmem:[%s346 + $0x44] sm:$0xf]
        %v496 = vld [vmem:[%s346 + $0x48] sm:$0xf]
        %v497 = vld [vmem:[%s346 + $0x4c] sm:$0xf]
        %v498 = vld [vmem:[%s346 + $0x50] sm:$0xf]
        %v499 = vld [vmem:[%s346 + $0x54] sm:$0xf]
        %v500 = vld [vmem:[%s346 + $0x58] sm:$0xf]
        %v501 = vld [vmem:[%s346 + $0x5c] sm:$0xf]
        %v502 = vld [vmem:[%s346 + $0x60] sm:$0xf]
        %v503 = vld [vmem:[%s346 + $0x64] sm:$0xf]
        %v504 = vld [vmem:[%s346 + $0x68] sm:$0xf]
        %v505 = vld [vmem:[%s346 + $0x6c] sm:$0xf]
        %v506 = vld [vmem:[%s346 + $0x70] sm:$0xf]
        %v507 = vld [vmem:[%s346 + $0x74] sm:$0xf]
        %v508 = vld [vmem:[%s346 + $0x78] sm:$0xf]
        %v509 = vld [vmem:[%s346 + $0x7c] sm:$0xf]
        %v510 = vld [vmem:[%s346 + $0x80] sm:$0xf]
        %v511 = vld [vmem:[%s346 + $0x84] sm:$0xf]
        %v512 = vld [vmem:[%s346 + $0x88] sm:$0xf]
        %v513 = vld [vmem:[%s346 + $0x8c] sm:$0xf]
        %v514 = vld [vmem:[%s346 + $0x90] sm:$0xf]
        %v515 = vld [vmem:[%s346 + $0x94] sm:$0xf]
        %v516 = vld [vmem:[%s346 + $0x98] sm:$0xf]
        %v517 = vld [vmem:[%s346 + $0x9c] sm:$0xf]
        %v518 = vld [vmem:[%s346 + $0xa0] sm:$0xf]
        %v519 = vld [vmem:[%s346 + $0xa4] sm:$0xf]
        %v520 = vld [vmem:[%s346 + $0xa8] sm:$0xf]
        %v521 = vld [vmem:[%s346 + $0xac] sm:$0xf]
        %v522 = vld [vmem:[%s346 + $0xb0] sm:$0xf]
        %v523 = vld [vmem:[%s346 + $0xb4] sm:$0xf]
        %v524 = vld [vmem:[%s346 + $0xb8] sm:$0xf]
        %v525 = vld [vmem:[%s346 + $0xbc] sm:$0xf]
        %v526 = vld [vmem:[%s346 + $0xc0] sm:$0xf]
        %v527 = vld [vmem:[%s346 + $0xc4] sm:$0xf]
        %v528 = vld [vmem:[%s346 + $0xc8] sm:$0xf]
        %v529 = vld [vmem:[%s346 + $0xcc] sm:$0xf]
        %v530 = vld [vmem:[%s346 + $0xd0] sm:$0xf]
        %v531 = vld [vmem:[%s346 + $0xd4] sm:$0xf]
        %v532 = vld [vmem:[%s346 + $0xd8] sm:$0xf]
        %v533 = vld [vmem:[%s346 + $0xdc] sm:$0xf]
        %v534 = vld [vmem:[%s346 + $0xe0] sm:$0xf]
        %v535 = vld [vmem:[%s346 + $0xe4] sm:$0xf]
        %v536 = vld [vmem:[%s346 + $0xe8] sm:$0xf]
        %v537 = vld [vmem:[%s346 + $0xec] sm:$0xf]
        %v538 = vld [vmem:[%s346 + $0xf0] sm:$0xf]
        %v539 = vld [vmem:[%s346 + $0xf4] sm:$0xf]
        %v540 = vld [vmem:[%s346 + $0xf8] sm:$0xf]
        %v541 = vld [vmem:[%s346 + $0xfc] sm:$0xf]
        %v542 = vld [vmem:[%s346 + $0x100] sm:$0xf]
        %v543 = vld [vmem:[%s346 + $0x104] sm:$0xf]
        %v544 = vld [vmem:[%s346 + $0x108] sm:$0xf]
        %v545 = vld [vmem:[%s346 + $0x10c] sm:$0xf]
        %v546 = vld [vmem:[%s346 + $0x110] sm:$0xf]
        %v547 = vld [vmem:[%s346 + $0x114] sm:$0xf]
        %v548 = vld [vmem:[%s346 + $0x118] sm:$0xf]
        %v549 = vld [vmem:[%s346 + $0x11c] sm:$0xf]
        %v550 = vld [vmem:[%s346 + $0x120] sm:$0xf]
        %v551 = vld [vmem:[%s346 + $0x124] sm:$0xf]
        %v552 = vld [vmem:[%s346 + $0x128] sm:$0xf]
        %v553 = vld [vmem:[%s346 + $0x12c] sm:$0xf]
        %v554 = vld [vmem:[%s346 + $0x130] sm:$0xf]
        %v555 = vld [vmem:[%s346 + $0x134] sm:$0xf]
        %v556 = vld [vmem:[%s346 + $0x138] sm:$0xf]
        %v557 = vld [vmem:[%s346 + $0x13c] sm:$0xf]
        %v558 = vld [vmem:[%s346 + $0x140] sm:$0xf]
        %v559 = vld [vmem:[%s346 + $0x144] sm:$0xf]
        %v560 = vld [vmem:[%s346 + $0x148] sm:$0xf]
        %v561 = vld [vmem:[%s346 + $0x14c] sm:$0xf]
        %v562 = vld [vmem:[%s346 + $0x150] sm:$0xf]
        %v563 = vld [vmem:[%s346 + $0x154] sm:$0xf]
        %v564 = vld [vmem:[%s346 + $0x158] sm:$0xf]
        %v565 = vld [vmem:[%s346 + $0x15c] sm:$0xf]
        %v566 = vld [vmem:[%s346 + $0x160] sm:$0xf]
        %v567 = vld [vmem:[%s346 + $0x164] sm:$0xf]
        %v568 = vld [vmem:[%s346 + $0x168] sm:$0xf]
        %v569 = vld [vmem:[%s346 + $0x16c] sm:$0xf]
        %v570 = vld [vmem:[%s346 + $0x170] sm:$0xf]
        %v571 = vld [vmem:[%s346 + $0x174] sm:$0xf]
        %v572 = vld [vmem:[%s346 + $0x178] sm:$0xf]
        %v573 = vld [vmem:[%s346 + $0x17c] sm:$0xf]
        %v574 = vld [vmem:[%s346 + $0x180] sm:$0xf]
        %v575 = vld [vmem:[%s346 + $0x184] sm:$0xf]
        %v576 = vld [vmem:[%s346 + $0x188] sm:$0xf]
        %v577 = vld [vmem:[%s346 + $0x18c] sm:$0xf]
        %v578 = vld [vmem:[%s346 + $0x190] sm:$0xf]
        %v579 = vld [vmem:[%s346 + $0x194] sm:$0xf]
        %v580 = vld [vmem:[%s346 + $0x198] sm:$0xf]
        %v581 = vld [vmem:[%s346 + $0x19c] sm:$0xf]
        %v582 = vld [vmem:[%s346 + $0x1a0] sm:$0xf]
        %v583 = vld [vmem:[%s346 + $0x1a4] sm:$0xf]
        %v584 = vld [vmem:[%s346 + $0x1a8] sm:$0xf]
        %v585 = vld [vmem:[%s346 + $0x1ac] sm:$0xf]
        %v586 = vld [vmem:[%s346 + $0x1b0] sm:$0xf]
        %v587 = vld [vmem:[%s346 + $0x1b4] sm:$0xf]
        %v588 = vld [vmem:[%s346 + $0x1b8] sm:$0xf]
        %v589 = vld [vmem:[%s346 + $0x1bc] sm:$0xf]
        %v590 = vld [vmem:[%s346 + $0x1c0] sm:$0xf]
        %v591 = vld [vmem:[%s346 + $0x1c4] sm:$0xf]
        %v592 = vld [vmem:[%s346 + $0x1c8] sm:$0xf]
        %v593 = vld [vmem:[%s346 + $0x1cc] sm:$0xf]
        %v594 = vld [vmem:[%s346 + $0x1d0] sm:$0xf]
        %v595 = vld [vmem:[%s346 + $0x1d4] sm:$0xf]
        %v596 = vld [vmem:[%s346 + $0x1d8] sm:$0xf]
        %v597 = vld [vmem:[%s346 + $0x1dc] sm:$0xf]
        %v598 = vld [vmem:[%s346 + $0x1e0] sm:$0xf]
        %v599 = vld [vmem:[%s346 + $0x1e4] sm:$0xf]
        %v600 = vld [vmem:[%s346 + $0x1e8] sm:$0xf]
        %v601 = vld [vmem:[%s346 + $0x1ec] sm:$0xf]
        %v602 = vld [vmem:[%s346 + $0x1f0] sm:$0xf]
        %v603 = vld [vmem:[%s346 + $0x1f4] sm:$0xf]
        %v604 = vld [vmem:[%s346 + $0x1f8] sm:$0xf]
        %v605 = vld [vmem:[%s346 + $0x1fc] sm:$0xf]
        %v734 = vunpack.c.l.b16 %v350
        %v735 = vunpack.c.h.b16 %v350
        %v736 = vunpack.c.l.b16 %v351
        %v737 = vunpack.c.h.b16 %v351
        %v738 = vunpack.c.l.b16 %v352
        %v739 = vunpack.c.h.b16 %v352
        %v740 = vunpack.c.l.b16 %v353
        %v741 = vunpack.c.h.b16 %v353
        %v742 = vunpack.c.l.b16 %v354
        %v743 = vunpack.c.h.b16 %v354
        %v744 = vunpack.c.l.b16 %v355
        %v745 = vunpack.c.h.b16 %v355
        %v746 = vunpack.c.l.b16 %v356
        %v747 = vunpack.c.h.b16 %v356
        %v748 = vunpack.c.l.b16 %v357
        %v749 = vunpack.c.h.b16 %v357
        %v750 = vunpack.c.l.b16 %v358
        %v751 = vunpack.c.h.b16 %v358
        %v752 = vunpack.c.l.b16 %v359
        %v753 = vunpack.c.h.b16 %v359
        %v754 = vunpack.c.l.b16 %v360
        %v755 = vunpack.c.h.b16 %v360
        %v756 = vunpack.c.l.b16 %v361
        %v757 = vunpack.c.h.b16 %v361
        %v758 = vunpack.c.l.b16 %v362
        %v759 = vunpack.c.h.b16 %v362
        %v760 = vunpack.c.l.b16 %v363
        %v761 = vunpack.c.h.b16 %v363
        %v762 = vunpack.c.l.b16 %v364
        %v763 = vunpack.c.h.b16 %v364
        %v764 = vunpack.c.l.b16 %v365
        %v765 = vunpack.c.h.b16 %v365
        %v766 = vunpack.c.l.b16 %v366
        %v767 = vunpack.c.h.b16 %v366
        %v768 = vunpack.c.l.b16 %v367
        %v769 = vunpack.c.h.b16 %v367
        %v770 = vunpack.c.l.b16 %v368
        %v771 = vunpack.c.h.b16 %v368
        %v772 = vunpack.c.l.b16 %v369
        %v773 = vunpack.c.h.b16 %v369
        %v774 = vunpack.c.l.b16 %v370
        %v775 = vunpack.c.h.b16 %v370
        %v776 = vunpack.c.l.b16 %v371
        %v777 = vunpack.c.h.b16 %v371
        %v778 = vunpack.c.l.b16 %v372
        %v779 = vunpack.c.h.b16 %v372
        %v780 = vunpack.c.l.b16 %v373
        %v781 = vunpack.c.h.b16 %v373
        %v782 = vunpack.c.l.b16 %v374
        %v783 = vunpack.c.h.b16 %v374
        %v784 = vunpack.c.l.b16 %v375
        %v785 = vunpack.c.h.b16 %v375
        %v786 = vunpack.c.l.b16 %v376
        %v787 = vunpack.c.h.b16 %v376
        %v788 = vunpack.c.l.b16 %v377
        %v789 = vunpack.c.h.b16 %v377
        %v790 = vunpack.c.l.b16 %v378
        %v791 = vunpack.c.h.b16 %v378
        %v792 = vunpack.c.l.b16 %v379
        %v793 = vunpack.c.h.b16 %v379
        %v794 = vunpack.c.l.b16 %v380
        %v795 = vunpack.c.h.b16 %v380
        %v796 = vunpack.c.l.b16 %v381
        %v797 = vunpack.c.h.b16 %v381
        %v798 = vunpack.c.l.b16 %v382
        %v799 = vunpack.c.h.b16 %v382
        %v800 = vunpack.c.l.b16 %v383
        %v801 = vunpack.c.h.b16 %v383
        %v802 = vunpack.c.l.b16 %v384
        %v803 = vunpack.c.h.b16 %v384
        %v804 = vunpack.c.l.b16 %v385
        %v805 = vunpack.c.h.b16 %v385
        %v806 = vunpack.c.l.b16 %v386
        %v807 = vunpack.c.h.b16 %v386
        %v808 = vunpack.c.l.b16 %v387
        %v809 = vunpack.c.h.b16 %v387
        %v810 = vunpack.c.l.b16 %v388
        %v811 = vunpack.c.h.b16 %v388
        %v812 = vunpack.c.l.b16 %v389
        %v813 = vunpack.c.h.b16 %v389
        %v814 = vunpack.c.l.b16 %v390
        %v815 = vunpack.c.h.b16 %v390
        %v816 = vunpack.c.l.b16 %v391
        %v817 = vunpack.c.h.b16 %v391
        %v818 = vunpack.c.l.b16 %v392
        %v819 = vunpack.c.h.b16 %v392
        %v820 = vunpack.c.l.b16 %v393
        %v821 = vunpack.c.h.b16 %v393
        %v822 = vunpack.c.l.b16 %v394
        %v823 = vunpack.c.h.b16 %v394
        %v824 = vunpack.c.l.b16 %v395
        %v825 = vunpack.c.h.b16 %v395
        %v826 = vunpack.c.l.b16 %v396
        %v827 = vunpack.c.h.b16 %v396
        %v828 = vunpack.c.l.b16 %v397
        %v829 = vunpack.c.h.b16 %v397
        %v830 = vunpack.c.l.b16 %v398
        %v831 = vunpack.c.h.b16 %v398
        %v832 = vunpack.c.l.b16 %v399
        %v833 = vunpack.c.h.b16 %v399
        %v834 = vunpack.c.l.b16 %v400
        %v835 = vunpack.c.h.b16 %v400
        %v836 = vunpack.c.l.b16 %v401
        %v837 = vunpack.c.h.b16 %v401
        %v838 = vunpack.c.l.b16 %v402
        %v839 = vunpack.c.h.b16 %v402
        %v840 = vunpack.c.l.b16 %v403
        %v841 = vunpack.c.h.b16 %v403
        %v842 = vunpack.c.l.b16 %v404
        %v843 = vunpack.c.h.b16 %v404
        %v844 = vunpack.c.l.b16 %v405
        %v845 = vunpack.c.h.b16 %v405
        %v846 = vunpack.c.l.b16 %v406
        %v847 = vunpack.c.h.b16 %v406
        %v848 = vunpack.c.l.b16 %v407
        %v849 = vunpack.c.h.b16 %v407
        %v850 = vunpack.c.l.b16 %v408
        %v851 = vunpack.c.h.b16 %v408
        %v852 = vunpack.c.l.b16 %v409
        %v853 = vunpack.c.h.b16 %v409
        %v854 = vunpack.c.l.b16 %v410
        %v855 = vunpack.c.h.b16 %v410
        %v856 = vunpack.c.l.b16 %v411
        %v857 = vunpack.c.h.b16 %v411
        %v858 = vunpack.c.l.b16 %v412
        %v859 = vunpack.c.h.b16 %v412
        %v860 = vunpack.c.l.b16 %v413
        %v861 = vunpack.c.h.b16 %v413
        %v862 = vunpack.c.l.b16 %v414
        %v863 = vunpack.c.h.b16 %v414
        %v864 = vunpack.c.l.b16 %v415
        %v865 = vunpack.c.h.b16 %v415
        %v866 = vunpack.c.l.b16 %v416
        %v867 = vunpack.c.h.b16 %v416
        %v868 = vunpack.c.l.b16 %v417
        %v869 = vunpack.c.h.b16 %v417
        %v870 = vunpack.c.l.b16 %v418
        %v871 = vunpack.c.h.b16 %v418
        %v872 = vunpack.c.l.b16 %v419
        %v873 = vunpack.c.h.b16 %v419
        %v874 = vunpack.c.l.b16 %v420
        %v875 = vunpack.c.h.b16 %v420
        %v876 = vunpack.c.l.b16 %v421
        %v877 = vunpack.c.h.b16 %v421
        %v878 = vunpack.c.l.b16 %v422
        %v879 = vunpack.c.h.b16 %v422
        %v880 = vunpack.c.l.b16 %v423
        %v881 = vunpack.c.h.b16 %v423
        %v882 = vunpack.c.l.b16 %v424
        %v883 = vunpack.c.h.b16 %v424
        %v884 = vunpack.c.l.b16 %v425
        %v885 = vunpack.c.h.b16 %v425
        %v886 = vunpack.c.l.b16 %v426
        %v887 = vunpack.c.h.b16 %v426
        %v888 = vunpack.c.l.b16 %v427
        %v889 = vunpack.c.h.b16 %v427
        %v890 = vunpack.c.l.b16 %v428
        %v891 = vunpack.c.h.b16 %v428
        %v892 = vunpack.c.l.b16 %v429
        %v893 = vunpack.c.h.b16 %v429
        %v894 = vunpack.c.l.b16 %v430
        %v895 = vunpack.c.h.b16 %v430
        %v896 = vunpack.c.l.b16 %v431
        %v897 = vunpack.c.h.b16 %v431
        %v898 = vunpack.c.l.b16 %v432
        %v899 = vunpack.c.h.b16 %v432
        %v900 = vunpack.c.l.b16 %v433
        %v901 = vunpack.c.h.b16 %v433
        %v902 = vunpack.c.l.b16 %v434
        %v903 = vunpack.c.h.b16 %v434
        %v904 = vunpack.c.l.b16 %v435
        %v905 = vunpack.c.h.b16 %v435
        %v906 = vunpack.c.l.b16 %v436
        %v907 = vunpack.c.h.b16 %v436
        %v908 = vunpack.c.l.b16 %v437
        %v909 = vunpack.c.h.b16 %v437
        %v910 = vunpack.c.l.b16 %v438
        %v911 = vunpack.c.h.b16 %v438
        %v912 = vunpack.c.l.b16 %v439
        %v913 = vunpack.c.h.b16 %v439
        %v914 = vunpack.c.l.b16 %v440
        %v915 = vunpack.c.h.b16 %v440
        %v916 = vunpack.c.l.b16 %v441
        %v917 = vunpack.c.h.b16 %v441
        %v918 = vunpack.c.l.b16 %v442
        %v919 = vunpack.c.h.b16 %v442
        %v920 = vunpack.c.l.b16 %v443
        %v921 = vunpack.c.h.b16 %v443
        %v922 = vunpack.c.l.b16 %v444
        %v923 = vunpack.c.h.b16 %v444
        %v924 = vunpack.c.l.b16 %v445
        %v925 = vunpack.c.h.b16 %v445
        %v926 = vunpack.c.l.b16 %v446
        %v927 = vunpack.c.h.b16 %v446
        %v928 = vunpack.c.l.b16 %v447
        %v929 = vunpack.c.h.b16 %v447
        %v930 = vunpack.c.l.b16 %v448
        %v931 = vunpack.c.h.b16 %v448
        %v932 = vunpack.c.l.b16 %v449
        %v933 = vunpack.c.h.b16 %v449
        %v934 = vunpack.c.l.b16 %v450
        %v935 = vunpack.c.h.b16 %v450
        %v936 = vunpack.c.l.b16 %v451
        %v937 = vunpack.c.h.b16 %v451
        %v938 = vunpack.c.l.b16 %v452
        %v939 = vunpack.c.h.b16 %v452
        %v940 = vunpack.c.l.b16 %v453
        %v941 = vunpack.c.h.b16 %v453
        %v942 = vunpack.c.l.b16 %v454
        %v943 = vunpack.c.h.b16 %v454
        %v944 = vunpack.c.l.b16 %v455
        %v945 = vunpack.c.h.b16 %v455
        %v946 = vunpack.c.l.b16 %v456
        %v947 = vunpack.c.h.b16 %v456
        %v948 = vunpack.c.l.b16 %v457
        %v949 = vunpack.c.h.b16 %v457
        %v950 = vunpack.c.l.b16 %v458
        %v951 = vunpack.c.h.b16 %v458
        %v952 = vunpack.c.l.b16 %v459
        %v953 = vunpack.c.h.b16 %v459
        %v954 = vunpack.c.l.b16 %v460
        %v955 = vunpack.c.h.b16 %v460
        %v956 = vunpack.c.l.b16 %v461
        %v957 = vunpack.c.h.b16 %v461
        %v958 = vunpack.c.l.b16 %v462
        %v959 = vunpack.c.h.b16 %v462
        %v960 = vunpack.c.l.b16 %v463
        %v961 = vunpack.c.h.b16 %v463
        %v962 = vunpack.c.l.b16 %v464
        %v963 = vunpack.c.h.b16 %v464
        %v964 = vunpack.c.l.b16 %v465
        %v965 = vunpack.c.h.b16 %v465
        %v966 = vunpack.c.l.b16 %v466
        %v967 = vunpack.c.h.b16 %v466
        %v968 = vunpack.c.l.b16 %v467
        %v969 = vunpack.c.h.b16 %v467
        %v970 = vunpack.c.l.b16 %v468
        %v971 = vunpack.c.h.b16 %v468
        %v972 = vunpack.c.l.b16 %v469
        %v973 = vunpack.c.h.b16 %v469
        %v974 = vunpack.c.l.b16 %v470
        %v975 = vunpack.c.h.b16 %v470
        %v976 = vunpack.c.l.b16 %v471
        %v977 = vunpack.c.h.b16 %v471
        %v978 = vunpack.c.l.b16 %v472
        %v979 = vunpack.c.h.b16 %v472
        %v980 = vunpack.c.l.b16 %v473
        %v981 = vunpack.c.h.b16 %v473
        %v982 = vunpack.c.l.b16 %v474
        %v983 = vunpack.c.h.b16 %v474
        %v984 = vunpack.c.l.b16 %v475
        %v985 = vunpack.c.h.b16 %v475
        %v986 = vunpack.c.l.b16 %v476
        %v987 = vunpack.c.h.b16 %v476
        %v988 = vunpack.c.l.b16 %v477
        %v989 = vunpack.c.h.b16 %v477
        %v990 = vpack.c.b16 %v742, %v734
        %v991 = vpack.c.b16 %v743, %v735
        %v992 = vpack.c.b16 %v744, %v736
        %v993 = vpack.c.b16 %v745, %v737
        %v994 = vpack.c.b16 %v746, %v738
        %v995 = vpack.c.b16 %v747, %v739
        %v996 = vpack.c.b16 %v748, %v740
        %v997 = vpack.c.b16 %v749, %v741
        %v998 = vpack.c.b16 %v758, %v750
        %v999 = vpack.c.b16 %v759, %v751
        %v1000 = vpack.c.b16 %v760, %v752
        %v1001 = vpack.c.b16 %v761, %v753
        %v1002 = vpack.c.b16 %v762, %v754
        %v1003 = vpack.c.b16 %v763, %v755
        %v1004 = vpack.c.b16 %v764, %v756
        %v1005 = vpack.c.b16 %v765, %v757
        %v1006 = vpack.c.b16 %v774, %v766
        %v1007 = vpack.c.b16 %v775, %v767
        %v1008 = vpack.c.b16 %v776, %v768
        %v1009 = vpack.c.b16 %v777, %v769
        %v1010 = vpack.c.b16 %v778, %v770
        %v1011 = vpack.c.b16 %v779, %v771
        %v1012 = vpack.c.b16 %v780, %v772
        %v1013 = vpack.c.b16 %v781, %v773
        %v1014 = vpack.c.b16 %v790, %v782
        %v1015 = vpack.c.b16 %v791, %v783
        %v1016 = vpack.c.b16 %v792, %v784
        %v1017 = vpack.c.b16 %v793, %v785
        %v1018 = vpack.c.b16 %v794, %v786
        %v1019 = vpack.c.b16 %v795, %v787
        %v1020 = vpack.c.b16 %v796, %v788
        %v1021 = vpack.c.b16 %v797, %v789
        %v1022 = vpack.c.b16 %v806, %v798
        %v1023 = vpack.c.b16 %v807, %v799
        %v1024 = vpack.c.b16 %v808, %v800
        %v1025 = vpack.c.b16 %v809, %v801
        %v1026 = vpack.c.b16 %v810, %v802
        %v1027 = vpack.c.b16 %v811, %v803
        %v1028 = vpack.c.b16 %v812, %v804
        %v1029 = vpack.c.b16 %v813, %v805
        %v1030 = vpack.c.b16 %v822, %v814
        %v1031 = vpack.c.b16 %v823, %v815
        %v1032 = vpack.c.b16 %v824, %v816
        %v1033 = vpack.c.b16 %v825, %v817
        %v1034 = vpack.c.b16 %v826, %v818
        %v1035 = vpack.c.b16 %v827, %v819
        %v1036 = vpack.c.b16 %v828, %v820
        %v1037 = vpack.c.b16 %v829, %v821
        %v1038 = vpack.c.b16 %v838, %v830
        %v1039 = vpack.c.b16 %v839, %v831
        %v1040 = vpack.c.b16 %v840, %v832
        %v1041 = vpack.c.b16 %v841, %v833
        %v1042 = vpack.c.b16 %v842, %v834
        %v1043 = vpack.c.b16 %v843, %v835
        %v1044 = vpack.c.b16 %v844, %v836
        %v1045 = vpack.c.b16 %v845, %v837
        %v1046 = vpack.c.b16 %v854, %v846
        %v1047 = vpack.c.b16 %v855, %v847
        %v1048 = vpack.c.b16 %v856, %v848
        %v1049 = vpack.c.b16 %v857, %v849
        %v1050 = vpack.c.b16 %v858, %v850
        %v1051 = vpack.c.b16 %v859, %v851
        %v1052 = vpack.c.b16 %v860, %v852
        %v1053 = vpack.c.b16 %v861, %v853
        %v1054 = vpack.c.b16 %v870, %v862
        %v1055 = vpack.c.b16 %v871, %v863
        %v1056 = vpack.c.b16 %v872, %v864
        %v1057 = vpack.c.b16 %v873, %v865
        %v1058 = vpack.c.b16 %v874, %v866
        %v1059 = vpack.c.b16 %v875, %v867
        %v1060 = vpack.c.b16 %v876, %v868
        %v1061 = vpack.c.b16 %v877, %v869
        %v1062 = vpack.c.b16 %v886, %v878
        %v1063 = vpack.c.b16 %v887, %v879
        %v1064 = vpack.c.b16 %v888, %v880
        %v1065 = vpack.c.b16 %v889, %v881
        %v1066 = vpack.c.b16 %v890, %v882
        %v1067 = vpack.c.b16 %v891, %v883
        %v1068 = vpack.c.b16 %v892, %v884
        %v1069 = vpack.c.b16 %v893, %v885
        %v1070 = vpack.c.b16 %v902, %v894
        %v1071 = vpack.c.b16 %v903, %v895
        %v1072 = vpack.c.b16 %v904, %v896
        %v1073 = vpack.c.b16 %v905, %v897
        %v1074 = vpack.c.b16 %v906, %v898
        %v1075 = vpack.c.b16 %v907, %v899
        %v1076 = vpack.c.b16 %v908, %v900
        %v1077 = vpack.c.b16 %v909, %v901
        %v1078 = vpack.c.b16 %v918, %v910
        %v1079 = vpack.c.b16 %v919, %v911
        %v1080 = vpack.c.b16 %v920, %v912
        %v1081 = vpack.c.b16 %v921, %v913
        %v1082 = vpack.c.b16 %v922, %v914
        %v1083 = vpack.c.b16 %v923, %v915
        %v1084 = vpack.c.b16 %v924, %v916
        %v1085 = vpack.c.b16 %v925, %v917
        %v1086 = vpack.c.b16 %v934, %v926
        %v1087 = vpack.c.b16 %v935, %v927
        %v1088 = vpack.c.b16 %v936, %v928
        %v1089 = vpack.c.b16 %v937, %v929
        %v1090 = vpack.c.b16 %v938, %v930
        %v1091 = vpack.c.b16 %v939, %v931
        %v1092 = vpack.c.b16 %v940, %v932
        %v1093 = vpack.c.b16 %v941, %v933
        %v1094 = vpack.c.b16 %v950, %v942
        %v1095 = vpack.c.b16 %v951, %v943
        %v1096 = vpack.c.b16 %v952, %v944
        %v1097 = vpack.c.b16 %v953, %v945
        %v1098 = vpack.c.b16 %v954, %v946
        %v1099 = vpack.c.b16 %v955, %v947
        %v1100 = vpack.c.b16 %v956, %v948
        %v1101 = vpack.c.b16 %v957, %v949
        %v1102 = vpack.c.b16 %v966, %v958
        %v1103 = vpack.c.b16 %v967, %v959
        %v1104 = vpack.c.b16 %v968, %v960
        %v1105 = vpack.c.b16 %v969, %v961
        %v1106 = vpack.c.b16 %v970, %v962
        %v1107 = vpack.c.b16 %v971, %v963
        %v1108 = vpack.c.b16 %v972, %v964
        %v1109 = vpack.c.b16 %v973, %v965
        %v1110 = vpack.c.b16 %v982, %v974
        %v1111 = vpack.c.b16 %v983, %v975
        %v1112 = vpack.c.b16 %v984, %v976
        %v1113 = vpack.c.b16 %v985, %v977
        %v1114 = vpack.c.b16 %v986, %v978
        %v1115 = vpack.c.b16 %v987, %v979
        %v1116 = vpack.c.b16 %v988, %v980
        %v1117 = vpack.c.b16 %v989, %v981
        %v1374 = vunpack.c.l.b16 %v478
        %v1375 = vunpack.c.l.b16 %v479
        %v1376 = vunpack.c.l.b16 %v480
        %v1377 = vunpack.c.l.b16 %v481
        %v1378 = vunpack.c.l.b16 %v482
        %v1379 = vunpack.c.l.b16 %v483
        %v1380 = vunpack.c.l.b16 %v484
        %v1381 = vunpack.c.l.b16 %v485
        %v1382 = vunpack.c.l.b16 %v486
        %v1383 = vunpack.c.l.b16 %v487
        %v1384 = vunpack.c.l.b16 %v488
        %v1385 = vunpack.c.l.b16 %v489
        %v1386 = vunpack.c.l.b16 %v490
        %v1387 = vunpack.c.l.b16 %v491
        %v1388 = vunpack.c.l.b16 %v492
        %v1389 = vunpack.c.l.b16 %v493
        %v1390 = vunpack.c.l.b16 %v494
        %v1391 = vunpack.c.l.b16 %v495
        %v1392 = vunpack.c.l.b16 %v496
        %v1393 = vunpack.c.l.b16 %v497
        %v1394 = vunpack.c.l.b16 %v498
        %v1395 = vunpack.c.l.b16 %v499
        %v1396 = vunpack.c.l.b16 %v500
        %v1397 = vunpack.c.l.b16 %v501
        %v1398 = vunpack.c.l.b16 %v502
        %v1399 = vunpack.c.l.b16 %v503
        %v1400 = vunpack.c.l.b16 %v504
        %v1401 = vunpack.c.l.b16 %v505
        %v1402 = vunpack.c.l.b16 %v506
        %v1403 = vunpack.c.l.b16 %v507
        %v1404 = vunpack.c.l.b16 %v508
        %v1405 = vunpack.c.l.b16 %v509
        %v1406 = vunpack.c.l.b16 %v510
        %v1407 = vunpack.c.l.b16 %v511
        %v1408 = vunpack.c.l.b16 %v512
        %v1409 = vunpack.c.l.b16 %v513
        %v1410 = vunpack.c.l.b16 %v514
        %v1411 = vunpack.c.l.b16 %v515
        %v1412 = vunpack.c.l.b16 %v516
        %v1413 = vunpack.c.l.b16 %v517
        %v1414 = vunpack.c.l.b16 %v518
        %v1415 = vunpack.c.l.b16 %v519
        %v1416 = vunpack.c.l.b16 %v520
        %v1417 = vunpack.c.l.b16 %v521
        %v1418 = vunpack.c.l.b16 %v522
        %v1419 = vunpack.c.l.b16 %v523
        %v1420 = vunpack.c.l.b16 %v524
        %v1421 = vunpack.c.l.b16 %v525
        %v1422 = vunpack.c.l.b16 %v526
        %v1423 = vunpack.c.l.b16 %v527
        %v1424 = vunpack.c.l.b16 %v528
        %v1425 = vunpack.c.l.b16 %v529
        %v1426 = vunpack.c.l.b16 %v530
        %v1427 = vunpack.c.l.b16 %v531
        %v1428 = vunpack.c.l.b16 %v532
        %v1429 = vunpack.c.l.b16 %v533
        %v1430 = vunpack.c.l.b16 %v534
        %v1431 = vunpack.c.l.b16 %v535
        %v1432 = vunpack.c.l.b16 %v536
        %v1433 = vunpack.c.l.b16 %v537
        %v1434 = vunpack.c.l.b16 %v538
        %v1435 = vunpack.c.l.b16 %v539
        %v1436 = vunpack.c.l.b16 %v540
        %v1437 = vunpack.c.l.b16 %v541
        %v1438 = vunpack.c.l.b16 %v542
        %v1439 = vunpack.c.l.b16 %v543
        %v1440 = vunpack.c.l.b16 %v544
        %v1441 = vunpack.c.l.b16 %v545
        %v1442 = vunpack.c.l.b16 %v546
        %v1443 = vunpack.c.l.b16 %v547
        %v1444 = vunpack.c.l.b16 %v548
        %v1445 = vunpack.c.l.b16 %v549
        %v1446 = vunpack.c.l.b16 %v550
        %v1447 = vunpack.c.l.b16 %v551
        %v1448 = vunpack.c.l.b16 %v552
        %v1449 = vunpack.c.l.b16 %v553
        %v1450 = vunpack.c.l.b16 %v554
        %v1451 = vunpack.c.l.b16 %v555
        %v1452 = vunpack.c.l.b16 %v556
        %v1453 = vunpack.c.l.b16 %v557
        %v1454 = vunpack.c.l.b16 %v558
        %v1455 = vunpack.c.l.b16 %v559
        %v1456 = vunpack.c.l.b16 %v560
        %v1457 = vunpack.c.l.b16 %v561
        %v1458 = vunpack.c.l.b16 %v562
        %v1459 = vunpack.c.l.b16 %v563
        %v1460 = vunpack.c.l.b16 %v564
        %v1461 = vunpack.c.l.b16 %v565
        %v1462 = vunpack.c.l.b16 %v566
        %v1463 = vunpack.c.l.b16 %v567
        %v1464 = vunpack.c.l.b16 %v568
        %v1465 = vunpack.c.l.b16 %v569
        %v1466 = vunpack.c.l.b16 %v570
        %v1467 = vunpack.c.l.b16 %v571
        %v1468 = vunpack.c.l.b16 %v572
        %v1469 = vunpack.c.l.b16 %v573
        %v1470 = vunpack.c.l.b16 %v574
        %v1471 = vunpack.c.l.b16 %v575
        %v1472 = vunpack.c.l.b16 %v576
        %v1473 = vunpack.c.l.b16 %v577
        %v1474 = vunpack.c.l.b16 %v578
        %v1475 = vunpack.c.l.b16 %v579
        %v1476 = vunpack.c.l.b16 %v580
        %v1477 = vunpack.c.l.b16 %v581
        %v1478 = vunpack.c.l.b16 %v582
        %v1479 = vunpack.c.l.b16 %v583
        %v1480 = vunpack.c.l.b16 %v584
        %v1481 = vunpack.c.l.b16 %v585
        %v1482 = vunpack.c.l.b16 %v586
        %v1483 = vunpack.c.l.b16 %v587
        %v1484 = vunpack.c.l.b16 %v588
        %v1485 = vunpack.c.l.b16 %v589
        %v1486 = vunpack.c.l.b16 %v590
        %v1487 = vunpack.c.l.b16 %v591
        %v1488 = vunpack.c.l.b16 %v592
        %v1489 = vunpack.c.l.b16 %v593
        %v1490 = vunpack.c.l.b16 %v594
        %v1491 = vunpack.c.l.b16 %v595
        %v1492 = vunpack.c.l.b16 %v596
        %v1493 = vunpack.c.l.b16 %v597
        %v1494 = vunpack.c.l.b16 %v598
        %v1495 = vunpack.c.l.b16 %v599
        %v1496 = vunpack.c.l.b16 %v600
        %v1497 = vunpack.c.l.b16 %v601
        %v1498 = vunpack.c.l.b16 %v602
        %v1499 = vunpack.c.l.b16 %v603
        %v1500 = vunpack.c.l.b16 %v604
        %v1501 = vunpack.c.l.b16 %v605
        %v1502 = vpack.c.b16 %v1375, %v1374
        %v1503 = vpack.c.b16 %v1377, %v1376
        %v1504 = vpack.c.b16 %v1379, %v1378
        %v1505 = vpack.c.b16 %v1381, %v1380
        %v1506 = vpack.c.b16 %v1383, %v1382
        %v1507 = vpack.c.b16 %v1385, %v1384
        %v1508 = vpack.c.b16 %v1387, %v1386
        %v1509 = vpack.c.b16 %v1389, %v1388
        %v1510 = vpack.c.b16 %v1391, %v1390
        %v1511 = vpack.c.b16 %v1393, %v1392
        %v1512 = vpack.c.b16 %v1395, %v1394
        %v1513 = vpack.c.b16 %v1397, %v1396
        %v1514 = vpack.c.b16 %v1399, %v1398
        %v1515 = vpack.c.b16 %v1401, %v1400
        %v1516 = vpack.c.b16 %v1403, %v1402
        %v1517 = vpack.c.b16 %v1405, %v1404
        %v1518 = vpack.c.b16 %v1407, %v1406
        %v1519 = vpack.c.b16 %v1409, %v1408
        %v1520 = vpack.c.b16 %v1411, %v1410
        %v1521 = vpack.c.b16 %v1413, %v1412
        %v1522 = vpack.c.b16 %v1415, %v1414
        %v1523 = vpack.c.b16 %v1417, %v1416
        %v1524 = vpack.c.b16 %v1419, %v1418
        %v1525 = vpack.c.b16 %v1421, %v1420
        %v1526 = vpack.c.b16 %v1423, %v1422
        %v1527 = vpack.c.b16 %v1425, %v1424
        %v1528 = vpack.c.b16 %v1427, %v1426
        %v1529 = vpack.c.b16 %v1429, %v1428
        %v1530 = vpack.c.b16 %v1431, %v1430
        %v1531 = vpack.c.b16 %v1433, %v1432
        %v1532 = vpack.c.b16 %v1435, %v1434
        %v1533 = vpack.c.b16 %v1437, %v1436
        %v1534 = vpack.c.b16 %v1439, %v1438
        %v1535 = vpack.c.b16 %v1441, %v1440
        %v1536 = vpack.c.b16 %v1443, %v1442
        %v1537 = vpack.c.b16 %v1445, %v1444
        %v1538 = vpack.c.b16 %v1447, %v1446
        %v1539 = vpack.c.b16 %v1449, %v1448
        %v1540 = vpack.c.b16 %v1451, %v1450
        %v1541 = vpack.c.b16 %v1453, %v1452
        %v1542 = vpack.c.b16 %v1455, %v1454
        %v1543 = vpack.c.b16 %v1457, %v1456
        %v1544 = vpack.c.b16 %v1459, %v1458
        %v1545 = vpack.c.b16 %v1461, %v1460
        %v1546 = vpack.c.b16 %v1463, %v1462
        %v1547 = vpack.c.b16 %v1465, %v1464
        %v1548 = vpack.c.b16 %v1467, %v1466
        %v1549 = vpack.c.b16 %v1469, %v1468
        %v1550 = vpack.c.b16 %v1471, %v1470
        %v1551 = vpack.c.b16 %v1473, %v1472
        %v1552 = vpack.c.b16 %v1475, %v1474
        %v1553 = vpack.c.b16 %v1477, %v1476
        %v1554 = vpack.c.b16 %v1479, %v1478
        %v1555 = vpack.c.b16 %v1481, %v1480
        %v1556 = vpack.c.b16 %v1483, %v1482
        %v1557 = vpack.c.b16 %v1485, %v1484
        %v1558 = vpack.c.b16 %v1487, %v1486
        %v1559 = vpack.c.b16 %v1489, %v1488
        %v1560 = vpack.c.b16 %v1491, %v1490
        %v1561 = vpack.c.b16 %v1493, %v1492
        %v1562 = vpack.c.b16 %v1495, %v1494
        %v1563 = vpack.c.b16 %v1497, %v1496
        %v1564 = vpack.c.b16 %v1499, %v1498
        %v1565 = vpack.c.b16 %v1501, %v1500
        %1630 = vmatprep.subr.bf16.mxu0 0
        %1631 = vmatpush1.bf16.msra.mxu0 %v1509
        %1632 = vmatprep.subr.bf16.mxu0 0
        %1633 = vmatpush1.bf16.msra.mxu0 %v1508
        %1634 = vmatprep.subr.bf16.mxu0 0
        %1635 = vmatpush1.bf16.msra.mxu0 %v1507
        %1636 = vmatprep.subr.bf16.mxu0 0
        %1637 = vmatpush1.bf16.msra.mxu0 %v1506
        %1638 = vmatprep.subr.bf16.mxu0 0
        %1639 = vmatpush1.bf16.msra.mxu0 %v1505
        %1640 = vmatprep.subr.bf16.mxu0 0
        %1641 = vmatpush1.bf16.msra.mxu0 %v1504
        %1642 = vmatprep.subr.bf16.mxu0 0
        %1643 = vmatpush1.bf16.msra.mxu0 %v1503
        %1644 = vmatprep.subr.bf16.mxu0 0
        %1645 = vmatpush1.bf16.msra.mxu0 %v1502
        %1646 = vmatprep.subr.bf16.mxu0 0
        %1647 = vmatpush2.bf16.msra.mxu0 %v1517
        %1648 = vmatprep.subr.bf16.mxu0 0
        %1649 = vmatpush2.bf16.msra.mxu0 %v1516
        %1650 = vmatprep.subr.bf16.mxu0 0
        %1651 = vmatpush2.bf16.msra.mxu0 %v1515
        %1652 = vmatprep.subr.bf16.mxu0 0
        %1653 = vmatpush2.bf16.msra.mxu0 %v1514
        %1654 = vmatprep.subr.bf16.mxu0 0
        %1655 = vmatpush2.bf16.msra.mxu0 %v1513
        %1656 = vmatprep.subr.bf16.mxu0 0
        %1657 = vmatpush2.bf16.msra.mxu0 %v1512
        %1658 = vmatprep.subr.bf16.mxu0 0
        %1659 = vmatpush2.bf16.msra.mxu0 %v1511
        %1660 = vmatprep.subr.bf16.mxu0 0
        %1661 = vmatpush2.bf16.msra.mxu0 %v1510
        %1662 = vmatprep.mubr.bf16.mxu0 %v991
        %1663 = vmatmul.mubr.bf16.gmra.mxu0 %v990
        %v1664 = vpop.f32.mrf.mxu0
        %v1665 = vadd.f32 0.0, %v1664
        %v1666 = vpop.f32.mrf.mxu0
        %v1667 = vpop.f32.mrf.mxu0
        %v1668 = vadd.f32 0.0, %v1667
        %v1669 = vpop.f32.mrf.mxu0
        %1670 = vmatprep.mubr.bf16.mxu0 %v999
        %1671 = vmatmul.mubr.bf16.gmra.mxu0 %v998
        %v1672 = vpop.f32.mrf.mxu0
        %v1673 = vadd.f32 0.0, %v1672
        %v1674 = vpop.f32.mrf.mxu0
        %v1675 = vpop.f32.mrf.mxu0
        %v1676 = vadd.f32 0.0, %v1675
        %v1677 = vpop.f32.mrf.mxu0
        %1678 = vmatprep.mubr.bf16.mxu0 %v1007
        %1679 = vmatmul.mubr.bf16.gmra.mxu0 %v1006
        %v1680 = vpop.f32.mrf.mxu0
        %v1681 = vadd.f32 0.0, %v1680
        %v1682 = vpop.f32.mrf.mxu0
        %v1683 = vpop.f32.mrf.mxu0
        %v1684 = vadd.f32 0.0, %v1683
        %v1685 = vpop.f32.mrf.mxu0
        %1686 = vmatprep.mubr.bf16.mxu0 %v1015
        %1687 = vmatmul.mubr.bf16.gmra.mxu0 %v1014
        %v1688 = vpop.f32.mrf.mxu0
        %v1689 = vadd.f32 0.0, %v1688
        %v1690 = vpop.f32.mrf.mxu0
        %v1691 = vpop.f32.mrf.mxu0
        %v1692 = vadd.f32 0.0, %v1691
        %v1693 = vpop.f32.mrf.mxu0
        %1694 = vmatprep.mubr.bf16.mxu0 %v1023
        %1695 = vmatmul.mubr.bf16.gmra.mxu0 %v1022
        %v1696 = vpop.f32.mrf.mxu0
        %v1697 = vadd.f32 0.0, %v1696
        %v1698 = vpop.f32.mrf.mxu0
        %v1699 = vpop.f32.mrf.mxu0
        %v1700 = vadd.f32 0.0, %v1699
        %v1701 = vpop.f32.mrf.mxu0
        %1702 = vmatprep.mubr.bf16.mxu0 %v1031
        %1703 = vmatmul.mubr.bf16.gmra.mxu0 %v1030
        %v1704 = vpop.f32.mrf.mxu0
        %v1705 = vadd.f32 0.0, %v1704
        %v1706 = vpop.f32.mrf.mxu0
        %v1707 = vpop.f32.mrf.mxu0
        %v1708 = vadd.f32 0.0, %v1707
        %v1709 = vpop.f32.mrf.mxu0
        %1710 = vmatprep.mubr.bf16.mxu0 %v1039
        %1711 = vmatmul.mubr.bf16.gmra.mxu0 %v1038
        %v1712 = vpop.f32.mrf.mxu0
        %v1713 = vadd.f32 0.0, %v1712
        %v1714 = vpop.f32.mrf.mxu0
        %v1715 = vpop.f32.mrf.mxu0
        %v1716 = vadd.f32 0.0, %v1715
        %v1717 = vpop.f32.mrf.mxu0
        %1718 = vmatprep.mubr.bf16.mxu0 %v1047
        %1719 = vmatmul.mubr.bf16.gmra.mxu0 %v1046
        %v1720 = vpop.f32.mrf.mxu0
        %v1721 = vadd.f32 0.0, %v1720
        %v1722 = vpop.f32.mrf.mxu0
        %v1723 = vpop.f32.mrf.mxu0
        %v1724 = vadd.f32 0.0, %v1723
        %v1725 = vpop.f32.mrf.mxu0
        %1726 = vmatprep.mubr.bf16.mxu0 %v1055
        %1727 = vmatmul.mubr.bf16.gmra.mxu0 %v1054
        %v1728 = vpop.f32.mrf.mxu0
        %v1729 = vadd.f32 0.0, %v1728
        %v1730 = vpop.f32.mrf.mxu0
        %v1731 = vpop.f32.mrf.mxu0
        %v1732 = vadd.f32 0.0, %v1731
        %v1733 = vpop.f32.mrf.mxu0
        %1734 = vmatprep.mubr.bf16.mxu0 %v1063
        %1735 = vmatmul.mubr.bf16.gmra.mxu0 %v1062
        %v1736 = vpop.f32.mrf.mxu0
        %v1737 = vadd.f32 0.0, %v1736
        %v1738 = vpop.f32.mrf.mxu0
        %v1739 = vpop.f32.mrf.mxu0
        %v1740 = vadd.f32 0.0, %v1739
        %v1741 = vpop.f32.mrf.mxu0
        %1742 = vmatprep.mubr.bf16.mxu0 %v1071
        %1743 = vmatmul.mubr.bf16.gmra.mxu0 %v1070
        %v1744 = vpop.f32.mrf.mxu0
        %v1745 = vadd.f32 0.0, %v1744
        %v1746 = vpop.f32.mrf.mxu0
        %v1747 = vpop.f32.mrf.mxu0
        %v1748 = vadd.f32 0.0, %v1747
        %v1749 = vpop.f32.mrf.mxu0
        %1750 = vmatprep.mubr.bf16.mxu0 %v1079
        %1751 = vmatmul.mubr.bf16.gmra.mxu0 %v1078
        %v1752 = vpop.f32.mrf.mxu0
        %v1753 = vadd.f32 0.0, %v1752
        %v1754 = vpop.f32.mrf.mxu0
        %v1755 = vpop.f32.mrf.mxu0
        %v1756 = vadd.f32 0.0, %v1755
        %v1757 = vpop.f32.mrf.mxu0
        %1758 = vmatprep.mubr.bf16.mxu0 %v1087
        %1759 = vmatmul.mubr.bf16.gmra.mxu0 %v1086
        %v1760 = vpop.f32.mrf.mxu0
        %v1761 = vadd.f32 0.0, %v1760
        %v1762 = vpop.f32.mrf.mxu0
        %v1763 = vpop.f32.mrf.mxu0
        %v1764 = vadd.f32 0.0, %v1763
        %v1765 = vpop.f32.mrf.mxu0
        %1766 = vmatprep.mubr.bf16.mxu0 %v1095
        %1767 = vmatmul.mubr.bf16.gmra.mxu0 %v1094
        %v1768 = vpop.f32.mrf.mxu0
        %v1769 = vadd.f32 0.0, %v1768
        %v1770 = vpop.f32.mrf.mxu0
        %v1771 = vpop.f32.mrf.mxu0
        %v1772 = vadd.f32 0.0, %v1771
        %v1773 = vpop.f32.mrf.mxu0
        %1774 = vmatprep.mubr.bf16.mxu0 %v1103
        %1775 = vmatmul.mubr.bf16.gmra.mxu0 %v1102
        %v1776 = vpop.f32.mrf.mxu0
        %v1777 = vadd.f32 0.0, %v1776
        %v1778 = vpop.f32.mrf.mxu0
        %v1779 = vpop.f32.mrf.mxu0
        %v1780 = vadd.f32 0.0, %v1779
        %v1781 = vpop.f32.mrf.mxu0
        %1782 = vmatprep.mubr.bf16.mxu0 %v1111
        %1783 = vmatmul.mubr.bf16.gmra.mxu0 %v1110
        %v1784 = vpop.f32.mrf.mxu0
        %v1785 = vadd.f32 0.0, %v1784
        %v1786 = vpop.f32.mrf.mxu0
        %v1787 = vpop.f32.mrf.mxu0
        %v1788 = vadd.f32 0.0, %v1787
        %v1789 = vpop.f32.mrf.mxu0
        %1790 = vdwg.mxu0
        %1791 = vmatprep.subr.bf16.mxu0 0
        %1792 = vmatpush1.bf16.msra.mxu0 %v1525
        %1793 = vmatprep.subr.bf16.mxu0 0
        %1794 = vmatpush1.bf16.msra.mxu0 %v1524
        %1795 = vmatprep.subr.bf16.mxu0 0
        %1796 = vmatpush1.bf16.msra.mxu0 %v1523
        %1797 = vmatprep.subr.bf16.mxu0 0
        %1798 = vmatpush1.bf16.msra.mxu0 %v1522
        %1799 = vmatprep.subr.bf16.mxu0 0
        %1800 = vmatpush1.bf16.msra.mxu0 %v1521
        %1801 = vmatprep.subr.bf16.mxu0 0
        %1802 = vmatpush1.bf16.msra.mxu0 %v1520
        %1803 = vmatprep.subr.bf16.mxu0 0
        %1804 = vmatpush1.bf16.msra.mxu0 %v1519
        %1805 = vmatprep.subr.bf16.mxu0 0
        %1806 = vmatpush1.bf16.msra.mxu0 %v1518
        %1807 = vmatprep.subr.bf16.mxu0 0
        %1808 = vmatpush2.bf16.msra.mxu0 %v1533
        %1809 = vmatprep.subr.bf16.mxu0 0
        %1810 = vmatpush2.bf16.msra.mxu0 %v1532
        %1811 = vmatprep.subr.bf16.mxu0 0
        %1812 = vmatpush2.bf16.msra.mxu0 %v1531
        %1813 = vmatprep.subr.bf16.mxu0 0
        %1814 = vmatpush2.bf16.msra.mxu0 %v1530
        %1815 = vmatprep.subr.bf16.mxu0 0
        %1816 = vmatpush2.bf16.msra.mxu0 %v1529
        %1817 = vmatprep.subr.bf16.mxu0 0
        %1818 = vmatpush2.bf16.msra.mxu0 %v1528
        %1819 = vmatprep.subr.bf16.mxu0 0
        %1820 = vmatpush2.bf16.msra.mxu0 %v1527
        %1821 = vmatprep.subr.bf16.mxu0 0
        %1822 = vmatpush2.bf16.msra.mxu0 %v1526
        %1823 = vmatprep.mubr.bf16.mxu0 %v993
        %1824 = vmatmul.mubr.bf16.gmra.mxu0 %v992
        %v1825 = vpop.f32.mrf.mxu0
        %v1826 = vadd.f32 %v1665, %v1825
        %v1827 = vpop.f32.mrf.mxu0
        %v1828 = vpop.f32.mrf.mxu0
        %v1829 = vadd.f32 %v1668, %v1828
        %v1830 = vpop.f32.mrf.mxu0
        %1831 = vmatprep.mubr.bf16.mxu0 %v1001
        %1832 = vmatmul.mubr.bf16.gmra.mxu0 %v1000
        %v1833 = vpop.f32.mrf.mxu0
        %v1834 = vadd.f32 %v1673, %v1833
        %v1835 = vpop.f32.mrf.mxu0
        %v1836 = vpop.f32.mrf.mxu0
        %v1837 = vadd.f32 %v1676, %v1836
        %v1838 = vpop.f32.mrf.mxu0
        %1839 = vmatprep.mubr.bf16.mxu0 %v1009
        %1840 = vmatmul.mubr.bf16.gmra.mxu0 %v1008
        %v1841 = vpop.f32.mrf.mxu0
        %v1842 = vadd.f32 %v1681, %v1841
        %v1843 = vpop.f32.mrf.mxu0
        %v1844 = vpop.f32.mrf.mxu0
        %v1845 = vadd.f32 %v1684, %v1844
        %v1846 = vpop.f32.mrf.mxu0
        %1847 = vmatprep.mubr.bf16.mxu0 %v1017
        %1848 = vmatmul.mubr.bf16.gmra.mxu0 %v1016
        %v1849 = vpop.f32.mrf.mxu0
        %v1850 = vadd.f32 %v1689, %v1849
        %v1851 = vpop.f32.mrf.mxu0
        %v1852 = vpop.f32.mrf.mxu0
        %v1853 = vadd.f32 %v1692, %v1852
        %v1854 = vpop.f32.mrf.mxu0
        %1855 = vmatprep.mubr.bf16.mxu0 %v1025
        %1856 = vmatmul.mubr.bf16.gmra.mxu0 %v1024
        %v1857 = vpop.f32.mrf.mxu0
        %v1858 = vadd.f32 %v1697, %v1857
        %v1859 = vpop.f32.mrf.mxu0
        %v1860 = vpop.f32.mrf.mxu0
        %v1861 = vadd.f32 %v1700, %v1860
        %v1862 = vpop.f32.mrf.mxu0
        %1863 = vmatprep.mubr.bf16.mxu0 %v1033
        %1864 = vmatmul.mubr.bf16.gmra.mxu0 %v1032
        %v1865 = vpop.f32.mrf.mxu0
        %v1866 = vadd.f32 %v1705, %v1865
        %v1867 = vpop.f32.mrf.mxu0
        %v1868 = vpop.f32.mrf.mxu0
        %v1869 = vadd.f32 %v1708, %v1868
        %v1870 = vpop.f32.mrf.mxu0
        %1871 = vmatprep.mubr.bf16.mxu0 %v1041
        %1872 = vmatmul.mubr.bf16.gmra.mxu0 %v1040
        %v1873 = vpop.f32.mrf.mxu0
        %v1874 = vadd.f32 %v1713, %v1873
        %v1875 = vpop.f32.mrf.mxu0
        %v1876 = vpop.f32.mrf.mxu0
        %v1877 = vadd.f32 %v1716, %v1876
        %v1878 = vpop.f32.mrf.mxu0
        %1879 = vmatprep.mubr.bf16.mxu0 %v1049
        %1880 = vmatmul.mubr.bf16.gmra.mxu0 %v1048
        %v1881 = vpop.f32.mrf.mxu0
        %v1882 = vadd.f32 %v1721, %v1881
        %v1883 = vpop.f32.mrf.mxu0
        %v1884 = vpop.f32.mrf.mxu0
        %v1885 = vadd.f32 %v1724, %v1884
        %v1886 = vpop.f32.mrf.mxu0
        %1887 = vmatprep.mubr.bf16.mxu0 %v1057
        %1888 = vmatmul.mubr.bf16.gmra.mxu0 %v1056
        %v1889 = vpop.f32.mrf.mxu0
        %v1890 = vadd.f32 %v1729, %v1889
        %v1891 = vpop.f32.mrf.mxu0
        %v1892 = vpop.f32.mrf.mxu0
        %v1893 = vadd.f32 %v1732, %v1892
        %v1894 = vpop.f32.mrf.mxu0
        %1895 = vmatprep.mubr.bf16.mxu0 %v1065
        %1896 = vmatmul.mubr.bf16.gmra.mxu0 %v1064
        %v1897 = vpop.f32.mrf.mxu0
        %v1898 = vadd.f32 %v1737, %v1897
        %v1899 = vpop.f32.mrf.mxu0
        %v1900 = vpop.f32.mrf.mxu0
        %v1901 = vadd.f32 %v1740, %v1900
        %v1902 = vpop.f32.mrf.mxu0
        %1903 = vmatprep.mubr.bf16.mxu0 %v1073
        %1904 = vmatmul.mubr.bf16.gmra.mxu0 %v1072
        %v1905 = vpop.f32.mrf.mxu0
        %v1906 = vadd.f32 %v1745, %v1905
        %v1907 = vpop.f32.mrf.mxu0
        %v1908 = vpop.f32.mrf.mxu0
        %v1909 = vadd.f32 %v1748, %v1908
        %v1910 = vpop.f32.mrf.mxu0
        %1911 = vmatprep.mubr.bf16.mxu0 %v1081
        %1912 = vmatmul.mubr.bf16.gmra.mxu0 %v1080
        %v1913 = vpop.f32.mrf.mxu0
        %v1914 = vadd.f32 %v1753, %v1913
        %v1915 = vpop.f32.mrf.mxu0
        %v1916 = vpop.f32.mrf.mxu0
        %v1917 = vadd.f32 %v1756, %v1916
        %v1918 = vpop.f32.mrf.mxu0
        %1919 = vmatprep.mubr.bf16.mxu0 %v1089
        %1920 = vmatmul.mubr.bf16.gmra.mxu0 %v1088
        %v1921 = vpop.f32.mrf.mxu0
        %v1922 = vadd.f32 %v1761, %v1921
        %v1923 = vpop.f32.mrf.mxu0
        %v1924 = vpop.f32.mrf.mxu0
        %v1925 = vadd.f32 %v1764, %v1924
        %v1926 = vpop.f32.mrf.mxu0
        %1927 = vmatprep.mubr.bf16.mxu0 %v1097
        %1928 = vmatmul.mubr.bf16.gmra.mxu0 %v1096
        %v1929 = vpop.f32.mrf.mxu0
        %v1930 = vadd.f32 %v1769, %v1929
        %v1931 = vpop.f32.mrf.mxu0
        %v1932 = vpop.f32.mrf.mxu0
        %v1933 = vadd.f32 %v1772, %v1932
        %v1934 = vpop.f32.mrf.mxu0
        %1935 = vmatprep.mubr.bf16.mxu0 %v1105
        %1936 = vmatmul.mubr.bf16.gmra.mxu0 %v1104
        %v1937 = vpop.f32.mrf.mxu0
        %v1938 = vadd.f32 %v1777, %v1937
        %v1939 = vpop.f32.mrf.mxu0
        %v1940 = vpop.f32.mrf.mxu0
        %v1941 = vadd.f32 %v1780, %v1940
        %v1942 = vpop.f32.mrf.mxu0
        %1943 = vmatprep.mubr.bf16.mxu0 %v1113
        %1944 = vmatmul.mubr.bf16.gmra.mxu0 %v1112
        %v1945 = vpop.f32.mrf.mxu0
        %v1946 = vadd.f32 %v1785, %v1945
        %v1947 = vpop.f32.mrf.mxu0
        %v1948 = vpop.f32.mrf.mxu0
        %v1949 = vadd.f32 %v1788, %v1948
        %v1950 = vpop.f32.mrf.mxu0
        %1951 = vdwg.mxu0
        %1952 = vmatprep.subr.bf16.mxu0 0
        %1953 = vmatpush1.bf16.msra.mxu0 %v1541
        %1954 = vmatprep.subr.bf16.mxu0 0
        %1955 = vmatpush1.bf16.msra.mxu0 %v1540
        %1956 = vmatprep.subr.bf16.mxu0 0
        %1957 = vmatpush1.bf16.msra.mxu0 %v1539
        %1958 = vmatprep.subr.bf16.mxu0 0
        %1959 = vmatpush1.bf16.msra.mxu0 %v1538
        %1960 = vmatprep.subr.bf16.mxu0 0
        %1961 = vmatpush1.bf16.msra.mxu0 %v1537
        %1962 = vmatprep.subr.bf16.mxu0 0
        %1963 = vmatpush1.bf16.msra.mxu0 %v1536
        %1964 = vmatprep.subr.bf16.mxu0 0
        %1965 = vmatpush1.bf16.msra.mxu0 %v1535
        %1966 = vmatprep.subr.bf16.mxu0 0
        %1967 = vmatpush1.bf16.msra.mxu0 %v1534
        %1968 = vmatprep.subr.bf16.mxu0 0
        %1969 = vmatpush2.bf16.msra.mxu0 %v1549
        %1970 = vmatprep.subr.bf16.mxu0 0
        %1971 = vmatpush2.bf16.msra.mxu0 %v1548
        %1972 = vmatprep.subr.bf16.mxu0 0
        %1973 = vmatpush2.bf16.msra.mxu0 %v1547
        %1974 = vmatprep.subr.bf16.mxu0 0
        %1975 = vmatpush2.bf16.msra.mxu0 %v1546
        %1976 = vmatprep.subr.bf16.mxu0 0
        %1977 = vmatpush2.bf16.msra.mxu0 %v1545
        %1978 = vmatprep.subr.bf16.mxu0 0
        %1979 = vmatpush2.bf16.msra.mxu0 %v1544
        %1980 = vmatprep.subr.bf16.mxu0 0
        %1981 = vmatpush2.bf16.msra.mxu0 %v1543
        %1982 = vmatprep.subr.bf16.mxu0 0
        %1983 = vmatpush2.bf16.msra.mxu0 %v1542
        %1984 = vmatprep.mubr.bf16.mxu0 %v995
        %1985 = vmatmul.mubr.bf16.gmra.mxu0 %v994
        %v1986 = vpop.f32.mrf.mxu0
        %v1987 = vadd.f32 %v1826, %v1986
        %v1988 = vpop.f32.mrf.mxu0
        %v1989 = vpop.f32.mrf.mxu0
        %v1990 = vadd.f32 %v1829, %v1989
        %v1991 = vpop.f32.mrf.mxu0
        %1992 = vmatprep.mubr.bf16.mxu0 %v1003
        %1993 = vmatmul.mubr.bf16.gmra.mxu0 %v1002
        %v1994 = vpop.f32.mrf.mxu0
        %v1995 = vadd.f32 %v1834, %v1994
        %v1996 = vpop.f32.mrf.mxu0
        %v1997 = vpop.f32.mrf.mxu0
        %v1998 = vadd.f32 %v1837, %v1997
        %v1999 = vpop.f32.mrf.mxu0
        %2000 = vmatprep.mubr.bf16.mxu0 %v1011
        %2001 = vmatmul.mubr.bf16.gmra.mxu0 %v1010
        %v2002 = vpop.f32.mrf.mxu0
        %v2003 = vadd.f32 %v1842, %v2002
        %v2004 = vpop.f32.mrf.mxu0
        %v2005 = vpop.f32.mrf.mxu0
        %v2006 = vadd.f32 %v1845, %v2005
        %v2007 = vpop.f32.mrf.mxu0
        %2008 = vmatprep.mubr.bf16.mxu0 %v1019
        %2009 = vmatmul.mubr.bf16.gmra.mxu0 %v1018
        %v2010 = vpop.f32.mrf.mxu0
        %v2011 = vadd.f32 %v1850, %v2010
        %v2012 = vpop.f32.mrf.mxu0
        %v2013 = vpop.f32.mrf.mxu0
        %v2014 = vadd.f32 %v1853, %v2013
        %v2015 = vpop.f32.mrf.mxu0
        %2016 = vmatprep.mubr.bf16.mxu0 %v1027
        %2017 = vmatmul.mubr.bf16.gmra.mxu0 %v1026
        %v2018 = vpop.f32.mrf.mxu0
        %v2019 = vadd.f32 %v1858, %v2018
        %v2020 = vpop.f32.mrf.mxu0
        %v2021 = vpop.f32.mrf.mxu0
        %v2022 = vadd.f32 %v1861, %v2021
        %v2023 = vpop.f32.mrf.mxu0
        %2024 = vmatprep.mubr.bf16.mxu0 %v1035
        %2025 = vmatmul.mubr.bf16.gmra.mxu0 %v1034
        %v2026 = vpop.f32.mrf.mxu0
        %v2027 = vadd.f32 %v1866, %v2026
        %v2028 = vpop.f32.mrf.mxu0
        %v2029 = vpop.f32.mrf.mxu0
        %v2030 = vadd.f32 %v1869, %v2029
        %v2031 = vpop.f32.mrf.mxu0
        %2032 = vmatprep.mubr.bf16.mxu0 %v1043
        %2033 = vmatmul.mubr.bf16.gmra.mxu0 %v1042
        %v2034 = vpop.f32.mrf.mxu0
        %v2035 = vadd.f32 %v1874, %v2034
        %v2036 = vpop.f32.mrf.mxu0
        %v2037 = vpop.f32.mrf.mxu0
        %v2038 = vadd.f32 %v1877, %v2037
        %v2039 = vpop.f32.mrf.mxu0
        %2040 = vmatprep.mubr.bf16.mxu0 %v1051
        %2041 = vmatmul.mubr.bf16.gmra.mxu0 %v1050
        %v2042 = vpop.f32.mrf.mxu0
        %v2043 = vadd.f32 %v1882, %v2042
        %v2044 = vpop.f32.mrf.mxu0
        %v2045 = vpop.f32.mrf.mxu0
        %v2046 = vadd.f32 %v1885, %v2045
        %v2047 = vpop.f32.mrf.mxu0
        %2048 = vmatprep.mubr.bf16.mxu0 %v1059
        %2049 = vmatmul.mubr.bf16.gmra.mxu0 %v1058
        %v2050 = vpop.f32.mrf.mxu0
        %v2051 = vadd.f32 %v1890, %v2050
        %v2052 = vpop.f32.mrf.mxu0
        %v2053 = vpop.f32.mrf.mxu0
        %v2054 = vadd.f32 %v1893, %v2053
        %v2055 = vpop.f32.mrf.mxu0
        %2056 = vmatprep.mubr.bf16.mxu0 %v1067
        %2057 = vmatmul.mubr.bf16.gmra.mxu0 %v1066
        %v2058 = vpop.f32.mrf.mxu0
        %v2059 = vadd.f32 %v1898, %v2058
        %v2060 = vpop.f32.mrf.mxu0
        %v2061 = vpop.f32.mrf.mxu0
        %v2062 = vadd.f32 %v1901, %v2061
        %v2063 = vpop.f32.mrf.mxu0
        %2064 = vmatprep.mubr.bf16.mxu0 %v1075
        %2065 = vmatmul.mubr.bf16.gmra.mxu0 %v1074
        %v2066 = vpop.f32.mrf.mxu0
        %v2067 = vadd.f32 %v1906, %v2066
        %v2068 = vpop.f32.mrf.mxu0
        %v2069 = vpop.f32.mrf.mxu0
        %v2070 = vadd.f32 %v1909, %v2069
        %v2071 = vpop.f32.mrf.mxu0
        %2072 = vmatprep.mubr.bf16.mxu0 %v1083
        %2073 = vmatmul.mubr.bf16.gmra.mxu0 %v1082
        %v2074 = vpop.f32.mrf.mxu0
        %v2075 = vadd.f32 %v1914, %v2074
        %v2076 = vpop.f32.mrf.mxu0
        %v2077 = vpop.f32.mrf.mxu0
        %v2078 = vadd.f32 %v1917, %v2077
        %v2079 = vpop.f32.mrf.mxu0
        %2080 = vmatprep.mubr.bf16.mxu0 %v1091
        %2081 = vmatmul.mubr.bf16.gmra.mxu0 %v1090
        %v2082 = vpop.f32.mrf.mxu0
        %v2083 = vadd.f32 %v1922, %v2082
        %v2084 = vpop.f32.mrf.mxu0
        %v2085 = vpop.f32.mrf.mxu0
        %v2086 = vadd.f32 %v1925, %v2085
        %v2087 = vpop.f32.mrf.mxu0
        %2088 = vmatprep.mubr.bf16.mxu0 %v1099
        %2089 = vmatmul.mubr.bf16.gmra.mxu0 %v1098
        %v2090 = vpop.f32.mrf.mxu0
        %v2091 = vadd.f32 %v1930, %v2090
        %v2092 = vpop.f32.mrf.mxu0
        %v2093 = vpop.f32.mrf.mxu0
        %v2094 = vadd.f32 %v1933, %v2093
        %v2095 = vpop.f32.mrf.mxu0
        %2096 = vmatprep.mubr.bf16.mxu0 %v1107
        %2097 = vmatmul.mubr.bf16.gmra.mxu0 %v1106
        %v2098 = vpop.f32.mrf.mxu0
        %v2099 = vadd.f32 %v1938, %v2098
        %v2100 = vpop.f32.mrf.mxu0
        %v2101 = vpop.f32.mrf.mxu0
        %v2102 = vadd.f32 %v1941, %v2101
        %v2103 = vpop.f32.mrf.mxu0
        %2104 = vmatprep.mubr.bf16.mxu0 %v1115
        %2105 = vmatmul.mubr.bf16.gmra.mxu0 %v1114
        %v2106 = vpop.f32.mrf.mxu0
        %v2107 = vadd.f32 %v1946, %v2106
        %v2108 = vpop.f32.mrf.mxu0
        %v2109 = vpop.f32.mrf.mxu0
        %v2110 = vadd.f32 %v1949, %v2109
        %v2111 = vpop.f32.mrf.mxu0
        %2112 = vdwg.mxu0
        %2113 = vmatprep.subr.bf16.mxu0 0
        %2114 = vmatpush1.bf16.msra.mxu0 %v1557
        %2115 = vmatprep.subr.bf16.mxu0 0
        %2116 = vmatpush1.bf16.msra.mxu0 %v1556
        %2117 = vmatprep.subr.bf16.mxu0 0
        %2118 = vmatpush1.bf16.msra.mxu0 %v1555
        %2119 = vmatprep.subr.bf16.mxu0 0
        %2120 = vmatpush1.bf16.msra.mxu0 %v1554
        %2121 = vmatprep.subr.bf16.mxu0 0
        %2122 = vmatpush1.bf16.msra.mxu0 %v1553
        %2123 = vmatprep.subr.bf16.mxu0 0
        %2124 = vmatpush1.bf16.msra.mxu0 %v1552
        %2125 = vmatprep.subr.bf16.mxu0 0
        %2126 = vmatpush1.bf16.msra.mxu0 %v1551
        %2127 = vmatprep.subr.bf16.mxu0 0
        %2128 = vmatpush1.bf16.msra.mxu0 %v1550
        %2129 = vmatprep.subr.bf16.mxu0 0
        %2130 = vmatpush2.bf16.msra.mxu0 %v1565
        %2131 = vmatprep.subr.bf16.mxu0 0
        %2132 = vmatpush2.bf16.msra.mxu0 %v1564
        %2133 = vmatprep.subr.bf16.mxu0 0
        %2134 = vmatpush2.bf16.msra.mxu0 %v1563
        %2135 = vmatprep.subr.bf16.mxu0 0
        %2136 = vmatpush2.bf16.msra.mxu0 %v1562
        %2137 = vmatprep.subr.bf16.mxu0 0
        %2138 = vmatpush2.bf16.msra.mxu0 %v1561
        %2139 = vmatprep.subr.bf16.mxu0 0
        %2140 = vmatpush2.bf16.msra.mxu0 %v1560
        %2141 = vmatprep.subr.bf16.mxu0 0
        %2142 = vmatpush2.bf16.msra.mxu0 %v1559
        %2143 = vmatprep.subr.bf16.mxu0 0
        %2144 = vmatpush2.bf16.msra.mxu0 %v1558
        %2145 = vmatprep.mubr.bf16.mxu0 %v997
        %2146 = vmatmul.mubr.bf16.gmra.mxu0 %v996
        %v2147 = vpop.f32.mrf.mxu0
        %v2148 = vadd.f32 %v1987, %v2147
        %v2149 = vpop.f32.mrf.mxu0
        %v2150 = vpop.f32.mrf.mxu0
        %v2151 = vadd.f32 %v1990, %v2150
        %v2152 = vpop.f32.mrf.mxu0
        %2153 = vmatprep.mubr.bf16.mxu0 %v1005
        %2154 = vmatmul.mubr.bf16.gmra.mxu0 %v1004
        %v2155 = vpop.f32.mrf.mxu0
        %v2156 = vadd.f32 %v1995, %v2155
        %v2157 = vpop.f32.mrf.mxu0
        %v2158 = vpop.f32.mrf.mxu0
        %v2159 = vadd.f32 %v1998, %v2158
        %v2160 = vpop.f32.mrf.mxu0
        %2161 = vmatprep.mubr.bf16.mxu0 %v1013
        %2162 = vmatmul.mubr.bf16.gmra.mxu0 %v1012
        %v2163 = vpop.f32.mrf.mxu0
        %v2164 = vadd.f32 %v2003, %v2163
        %v2165 = vpop.f32.mrf.mxu0
        %v2166 = vpop.f32.mrf.mxu0
        %v2167 = vadd.f32 %v2006, %v2166
        %v2168 = vpop.f32.mrf.mxu0
        %2169 = vmatprep.mubr.bf16.mxu0 %v1021
        %2170 = vmatmul.mubr.bf16.gmra.mxu0 %v1020
        %v2171 = vpop.f32.mrf.mxu0
        %v2172 = vadd.f32 %v2011, %v2171
        %v2173 = vpop.f32.mrf.mxu0
        %v2174 = vpop.f32.mrf.mxu0
        %v2175 = vadd.f32 %v2014, %v2174
        %v2176 = vpop.f32.mrf.mxu0
        %2177 = vmatprep.mubr.bf16.mxu0 %v1029
        %2178 = vmatmul.mubr.bf16.gmra.mxu0 %v1028
        %v2179 = vpop.f32.mrf.mxu0
        %v2180 = vadd.f32 %v2019, %v2179
        %v2181 = vpop.f32.mrf.mxu0
        %v2182 = vpop.f32.mrf.mxu0
        %v2183 = vadd.f32 %v2022, %v2182
        %v2184 = vpop.f32.mrf.mxu0
        %2185 = vmatprep.mubr.bf16.mxu0 %v1037
        %2186 = vmatmul.mubr.bf16.gmra.mxu0 %v1036
        %v2187 = vpop.f32.mrf.mxu0
        %v2188 = vadd.f32 %v2027, %v2187
        %v2189 = vpop.f32.mrf.mxu0
        %v2190 = vpop.f32.mrf.mxu0
        %v2191 = vadd.f32 %v2030, %v2190
        %v2192 = vpop.f32.mrf.mxu0
        %2193 = vmatprep.mubr.bf16.mxu0 %v1045
        %2194 = vmatmul.mubr.bf16.gmra.mxu0 %v1044
        %v2195 = vpop.f32.mrf.mxu0
        %v2196 = vadd.f32 %v2035, %v2195
        %v2197 = vpop.f32.mrf.mxu0
        %v2198 = vpop.f32.mrf.mxu0
        %v2199 = vadd.f32 %v2038, %v2198
        %v2200 = vpop.f32.mrf.mxu0
        %2201 = vmatprep.mubr.bf16.mxu0 %v1053
        %2202 = vmatmul.mubr.bf16.gmra.mxu0 %v1052
        %v2203 = vpop.f32.mrf.mxu0
        %v2204 = vadd.f32 %v2043, %v2203
        %v2205 = vpop.f32.mrf.mxu0
        %v2206 = vpop.f32.mrf.mxu0
        %v2207 = vadd.f32 %v2046, %v2206
        %v2208 = vpop.f32.mrf.mxu0
        %2209 = vmatprep.mubr.bf16.mxu0 %v1061
        %2210 = vmatmul.mubr.bf16.gmra.mxu0 %v1060
        %v2211 = vpop.f32.mrf.mxu0
        %v2212 = vadd.f32 %v2051, %v2211
        %v2213 = vpop.f32.mrf.mxu0
        %v2214 = vpop.f32.mrf.mxu0
        %v2215 = vadd.f32 %v2054, %v2214
        %v2216 = vpop.f32.mrf.mxu0
        %2217 = vmatprep.mubr.bf16.mxu0 %v1069
        %2218 = vmatmul.mubr.bf16.gmra.mxu0 %v1068
        %v2219 = vpop.f32.mrf.mxu0
        %v2220 = vadd.f32 %v2059, %v2219
        %v2221 = vpop.f32.mrf.mxu0
        %v2222 = vpop.f32.mrf.mxu0
        %v2223 = vadd.f32 %v2062, %v2222
        %v2224 = vpop.f32.mrf.mxu0
        %2225 = vmatprep.mubr.bf16.mxu0 %v1077
        %2226 = vmatmul.mubr.bf16.gmra.mxu0 %v1076
        %v2227 = vpop.f32.mrf.mxu0
        %v2228 = vadd.f32 %v2067, %v2227
        %v2229 = vpop.f32.mrf.mxu0
        %v2230 = vpop.f32.mrf.mxu0
        %v2231 = vadd.f32 %v2070, %v2230
        %v2232 = vpop.f32.mrf.mxu0
        %2233 = vmatprep.mubr.bf16.mxu0 %v1085
        %2234 = vmatmul.mubr.bf16.gmra.mxu0 %v1084
        %v2235 = vpop.f32.mrf.mxu0
        %v2236 = vadd.f32 %v2075, %v2235
        %v2237 = vpop.f32.mrf.mxu0
        %v2238 = vpop.f32.mrf.mxu0
        %v2239 = vadd.f32 %v2078, %v2238
        %v2240 = vpop.f32.mrf.mxu0
        %2241 = vmatprep.mubr.bf16.mxu0 %v1093
        %2242 = vmatmul.mubr.bf16.gmra.mxu0 %v1092
        %v2243 = vpop.f32.mrf.mxu0
        %v2244 = vadd.f32 %v2083, %v2243
        %v2245 = vpop.f32.mrf.mxu0
        %v2246 = vpop.f32.mrf.mxu0
        %v2247 = vadd.f32 %v2086, %v2246
        %v2248 = vpop.f32.mrf.mxu0
        %2249 = vmatprep.mubr.bf16.mxu0 %v1101
        %2250 = vmatmul.mubr.bf16.gmra.mxu0 %v1100
        %v2251 = vpop.f32.mrf.mxu0
        %v2252 = vadd.f32 %v2091, %v2251
        %v2253 = vpop.f32.mrf.mxu0
        %v2254 = vpop.f32.mrf.mxu0
        %v2255 = vadd.f32 %v2094, %v2254
        %v2256 = vpop.f32.mrf.mxu0
        %2257 = vmatprep.mubr.bf16.mxu0 %v1109
        %2258 = vmatmul.mubr.bf16.gmra.mxu0 %v1108
        %v2259 = vpop.f32.mrf.mxu0
        %v2260 = vadd.f32 %v2099, %v2259
        %v2261 = vpop.f32.mrf.mxu0
        %v2262 = vpop.f32.mrf.mxu0
        %v2263 = vadd.f32 %v2102, %v2262
        %v2264 = vpop.f32.mrf.mxu0
        %2265 = vmatprep.mubr.bf16.mxu0 %v1117
        %2266 = vmatmul.mubr.bf16.gmra.mxu0 %v1116
        %v2267 = vpop.f32.mrf.mxu0
        %v2268 = vadd.f32 %v2107, %v2267
        %v2269 = vpop.f32.mrf.mxu0
        %v2270 = vpop.f32.mrf.mxu0
        %v2271 = vadd.f32 %v2110, %v2270
        %v2272 = vpop.f32.mrf.mxu0
        %2273 = vdwg.mxu0
        %v2274 = vpack.c.bf16 %v2151, %v2148
        %v2275 = vpack.c.bf16 %v2159, %v2156
        %v2276 = vpack.c.bf16 %v2167, %v2164
        %v2277 = vpack.c.bf16 %v2175, %v2172
        %v2278 = vpack.c.bf16 %v2183, %v2180
        %v2279 = vpack.c.bf16 %v2191, %v2188
        %v2280 = vpack.c.bf16 %v2199, %v2196
        %v2281 = vpack.c.bf16 %v2207, %v2204
        %v2282 = vpack.c.bf16 %v2215, %v2212
        %v2283 = vpack.c.bf16 %v2223, %v2220
        %v2284 = vpack.c.bf16 %v2231, %v2228
        %v2285 = vpack.c.bf16 %v2239, %v2236
        %v2286 = vpack.c.bf16 %v2247, %v2244
        %v2287 = vpack.c.bf16 %v2255, %v2252
        %v2288 = vpack.c.bf16 %v2263, %v2260
        %v2289 = vpack.c.bf16 %v2271, %v2268
        %v2290 = vld [vmem:[#allocation5] sm:$0xf]
        %v2291 = vld [vmem:[#allocation5 + $0x4] sm:$0xf]
        %v2292 = vld [vmem:[#allocation5 + $0x8] sm:$0xf]
        %v2293 = vld [vmem:[#allocation5 + $0xc] sm:$0xf]
        %v2294 = vld [vmem:[#allocation5 + $0x10] sm:$0xf]
        %v2295 = vld [vmem:[#allocation5 + $0x14] sm:$0xf]
        %v2296 = vld [vmem:[#allocation5 + $0x18] sm:$0xf]
        %v2297 = vld [vmem:[#allocation5 + $0x1c] sm:$0xf]
        %v2298 = vld [vmem:[#allocation7] sm:$0x1]
        %v2300 = vlaneseq
        %v2301 = vshrl.u32 %v2300, 7
        %v2302 = vsub.s32 0, %v2301
        %v2303 = vrot.slane %v2298, %v2302
        %v2313 = vunpack.c.l.b16 %v2290
        %v2314 = vunpack.c.l.b16 %v2291
        %v2315 = vunpack.c.l.b16 %v2292
        %v2316 = vunpack.c.l.b16 %v2293
        %v2317 = vunpack.c.l.b16 %v2294
        %v2318 = vunpack.c.l.b16 %v2295
        %v2319 = vunpack.c.l.b16 %v2296
        %v2320 = vunpack.c.l.b16 %v2297
        %v2321 = vpack.c.b16 %v2314, %v2313
        %v2322 = vpack.c.b16 %v2316, %v2315
        %v2323 = vpack.c.b16 %v2318, %v2317
        %v2324 = vpack.c.b16 %v2320, %v2319
        %vm2329 = vcmask 523264
        %v2331 = vsel %vm2329, %v2274, 0
        %v2334 = vsel %vm2329, %v2275, 0
        %v2337 = vsel %vm2329, %v2276, 0
        %v2340 = vsel %vm2329, %v2277, 0
        %v2343 = vsel %vm2329, %v2278, 0
        %v2346 = vsel %vm2329, %v2279, 0
        %v2349 = vsel %vm2329, %v2280, 0
        %v2352 = vsel %vm2329, %v2281, 0
        %v2355 = vsel %vm2329, %v2282, 0
        %v2358 = vsel %vm2329, %v2283, 0
        %v2361 = vsel %vm2329, %v2284, 0
        %v2364 = vsel %vm2329, %v2285, 0
        %v2367 = vsel %vm2329, %v2286, 0
        %v2370 = vsel %vm2329, %v2287, 0
        %v2373 = vsel %vm2329, %v2288, 0
        %v2376 = vsel %vm2329, %v2289, 0
        %2378 = vmatprep.subr.bf16.mxu0 0
        %2379 = vmatpush1.bf16.msra.mxu0 0
        %2380 = vmatprep.subr.bf16.mxu0 0
        %2381 = vmatpush1.bf16.msra.mxu0 0
        %2382 = vmatprep.subr.bf16.mxu0 0
        %2383 = vmatpush1.bf16.msra.mxu0 0
        %2384 = vmatprep.subr.bf16.mxu0 0
        %2385 = vmatpush1.bf16.msra.mxu0 0
        %2386 = vmatprep.subr.bf16.mxu0 0
        %2387 = vmatpush1.bf16.msra.mxu0 %v2324
        %2388 = vmatprep.subr.bf16.mxu0 0
        %2389 = vmatpush1.bf16.msra.mxu0 %v2323
        %2390 = vmatprep.subr.bf16.mxu0 0
        %2391 = vmatpush1.bf16.msra.mxu0 %v2322
        %2392 = vmatprep.subr.bf16.mxu0 0
        %2393 = vmatpush1.bf16.msra.mxu0 %v2321
        %2394 = vmatprep.subr.bf16.mxu0 0
        %2395 = vmatpush2.bf16.msra.mxu0 0
        %2396 = vmatprep.subr.bf16.mxu0 0
        %2397 = vmatpush2.bf16.msra.mxu0 0
        %2398 = vmatprep.subr.bf16.mxu0 0
        %2399 = vmatpush2.bf16.msra.mxu0 0
        %2400 = vmatprep.subr.bf16.mxu0 0
        %2401 = vmatpush2.bf16.msra.mxu0 0
        %2402 = vmatprep.subr.bf16.mxu0 0
        %2403 = vmatpush2.bf16.msra.mxu0 0
        %2404 = vmatprep.subr.bf16.mxu0 0
        %2405 = vmatpush2.bf16.msra.mxu0 0
        %2406 = vmatprep.subr.bf16.mxu0 0
        %2407 = vmatpush2.bf16.msra.mxu0 0
        %2408 = vmatprep.subr.bf16.mxu0 0
        %2409 = vmatpush2.bf16.msra.mxu0 0
        %2410 = vmatprep.mubr.bf16.mxu0 0
        %2411 = vmatmul.mubr.bf16.gmra.mxu0 %v2331
        %v2412 = vpop.f32.mrf.mxu0
        %v2413 = vadd.f32 %v2303, %v2412
        %v2414 = vpop.f32.mrf.mxu0
        %v2415 = vpop.f32.mrf.mxu0
        %v2416 = vadd.f32 %v2303, %v2415
        %v2417 = vpop.f32.mrf.mxu0
        %2418 = vmatprep.mubr.bf16.mxu0 0
        %2419 = vmatmul.mubr.bf16.gmra.mxu0 %v2334
        %v2420 = vpop.f32.mrf.mxu0
        %v2421 = vadd.f32 %v2303, %v2420
        %v2422 = vpop.f32.mrf.mxu0
        %v2423 = vpop.f32.mrf.mxu0
        %v2424 = vadd.f32 %v2303, %v2423
        %v2425 = vpop.f32.mrf.mxu0
        %2426 = vmatprep.mubr.bf16.mxu0 0
        %2427 = vmatmul.mubr.bf16.gmra.mxu0 %v2337
        %v2428 = vpop.f32.mrf.mxu0
        %v2429 = vadd.f32 %v2303, %v2428
        %v2430 = vpop.f32.mrf.mxu0
        %v2431 = vpop.f32.mrf.mxu0
        %v2432 = vadd.f32 %v2303, %v2431
        %v2433 = vpop.f32.mrf.mxu0
        %2434 = vmatprep.mubr.bf16.mxu0 0
        %2435 = vmatmul.mubr.bf16.gmra.mxu0 %v2340
        %v2436 = vpop.f32.mrf.mxu0
        %v2437 = vadd.f32 %v2303, %v2436
        %v2438 = vpop.f32.mrf.mxu0
        %v2439 = vpop.f32.mrf.mxu0
        %v2440 = vadd.f32 %v2303, %v2439
        %v2441 = vpop.f32.mrf.mxu0
        %2442 = vmatprep.mubr.bf16.mxu0 0
        %2443 = vmatmul.mubr.bf16.gmra.mxu0 %v2343
        %v2444 = vpop.f32.mrf.mxu0
        %v2445 = vadd.f32 %v2303, %v2444
        %v2446 = vpop.f32.mrf.mxu0
        %v2447 = vpop.f32.mrf.mxu0
        %v2448 = vadd.f32 %v2303, %v2447
        %v2449 = vpop.f32.mrf.mxu0
        %2450 = vmatprep.mubr.bf16.mxu0 0
        %2451 = vmatmul.mubr.bf16.gmra.mxu0 %v2346
        %v2452 = vpop.f32.mrf.mxu0
        %v2453 = vadd.f32 %v2303, %v2452
        %v2454 = vpop.f32.mrf.mxu0
        %v2455 = vpop.f32.mrf.mxu0
        %v2456 = vadd.f32 %v2303, %v2455
        %v2457 = vpop.f32.mrf.mxu0
        %2458 = vmatprep.mubr.bf16.mxu0 0
        %2459 = vmatmul.mubr.bf16.gmra.mxu0 %v2349
        %v2460 = vpop.f32.mrf.mxu0
        %v2461 = vadd.f32 %v2303, %v2460
        %v2462 = vpop.f32.mrf.mxu0
        %v2463 = vpop.f32.mrf.mxu0
        %v2464 = vadd.f32 %v2303, %v2463
        %v2465 = vpop.f32.mrf.mxu0
        %2466 = vmatprep.mubr.bf16.mxu0 0
        %2467 = vmatmul.mubr.bf16.gmra.mxu0 %v2352
        %v2468 = vpop.f32.mrf.mxu0
        %v2469 = vadd.f32 %v2303, %v2468
        %v2470 = vpop.f32.mrf.mxu0
        %v2471 = vpop.f32.mrf.mxu0
        %v2472 = vadd.f32 %v2303, %v2471
        %v2473 = vpop.f32.mrf.mxu0
        %2474 = vmatprep.mubr.bf16.mxu0 0
        %2475 = vmatmul.mubr.bf16.gmra.mxu0 %v2355
        %v2476 = vpop.f32.mrf.mxu0
        %v2477 = vadd.f32 %v2303, %v2476
        %v2478 = vpop.f32.mrf.mxu0
        %v2479 = vpop.f32.mrf.mxu0
        %v2480 = vadd.f32 %v2303, %v2479
        %v2481 = vpop.f32.mrf.mxu0
        %2482 = vmatprep.mubr.bf16.mxu0 0
        %2483 = vmatmul.mubr.bf16.gmra.mxu0 %v2358
        %v2484 = vpop.f32.mrf.mxu0
        %v2485 = vadd.f32 %v2303, %v2484
        %v2486 = vpop.f32.mrf.mxu0
        %v2487 = vpop.f32.mrf.mxu0
        %v2488 = vadd.f32 %v2303, %v2487
        %v2489 = vpop.f32.mrf.mxu0
        %2490 = vmatprep.mubr.bf16.mxu0 0
        %2491 = vmatmul.mubr.bf16.gmra.mxu0 %v2361
        %v2492 = vpop.f32.mrf.mxu0
        %v2493 = vadd.f32 %v2303, %v2492
        %v2494 = vpop.f32.mrf.mxu0
        %v2495 = vpop.f32.mrf.mxu0
        %v2496 = vadd.f32 %v2303, %v2495
        %v2497 = vpop.f32.mrf.mxu0
        %2498 = vmatprep.mubr.bf16.mxu0 0
        %2499 = vmatmul.mubr.bf16.gmra.mxu0 %v2364
        %v2500 = vpop.f32.mrf.mxu0
        %v2501 = vadd.f32 %v2303, %v2500
        %v2502 = vpop.f32.mrf.mxu0
        %v2503 = vpop.f32.mrf.mxu0
        %v2504 = vadd.f32 %v2303, %v2503
        %v2505 = vpop.f32.mrf.mxu0
        %2506 = vmatprep.mubr.bf16.mxu0 0
        %2507 = vmatmul.mubr.bf16.gmra.mxu0 %v2367
        %v2508 = vpop.f32.mrf.mxu0
        %v2509 = vadd.f32 %v2303, %v2508
        %v2510 = vpop.f32.mrf.mxu0
        %v2511 = vpop.f32.mrf.mxu0
        %v2512 = vadd.f32 %v2303, %v2511
        %v2513 = vpop.f32.mrf.mxu0
        %2514 = vmatprep.mubr.bf16.mxu0 0
        %2515 = vmatmul.mubr.bf16.gmra.mxu0 %v2370
        %v2516 = vpop.f32.mrf.mxu0
        %v2517 = vadd.f32 %v2303, %v2516
        %v2518 = vpop.f32.mrf.mxu0
        %v2519 = vpop.f32.mrf.mxu0
        %v2520 = vadd.f32 %v2303, %v2519
        %v2521 = vpop.f32.mrf.mxu0
        %2522 = vmatprep.mubr.bf16.mxu0 0
        %2523 = vmatmul.mubr.bf16.gmra.mxu0 %v2373
        %v2524 = vpop.f32.mrf.mxu0
        %v2525 = vadd.f32 %v2303, %v2524
        %v2526 = vpop.f32.mrf.mxu0
        %v2527 = vpop.f32.mrf.mxu0
        %v2528 = vadd.f32 %v2303, %v2527
        %v2529 = vpop.f32.mrf.mxu0
        %2530 = vmatprep.mubr.bf16.mxu0 0
        %2531 = vmatmul.mubr.bf16.gmra.mxu0 %v2376
        %v2532 = vpop.f32.mrf.mxu0
        %v2533 = vadd.f32 %v2303, %v2532
        %v2534 = vpop.f32.mrf.mxu0
        %v2535 = vpop.f32.mrf.mxu0
        %v2536 = vadd.f32 %v2303, %v2535
        %v2537 = vpop.f32.mrf.mxu0
        %2538 = vdwg.mxu0
        %v2539 = vmax.f32 %v2413, 0.0
        %v2540 = vmax.f32 %v2416, 0.0
        %v2541 = vmax.f32 %v2421, 0.0
        %v2542 = vmax.f32 %v2424, 0.0
        %v2543 = vmax.f32 %v2429, 0.0
        %v2544 = vmax.f32 %v2432, 0.0
        %v2545 = vmax.f32 %v2437, 0.0
        %v2546 = vmax.f32 %v2440, 0.0
        %v2547 = vmax.f32 %v2445, 0.0
        %v2548 = vmax.f32 %v2448, 0.0
        %v2549 = vmax.f32 %v2453, 0.0
        %v2550 = vmax.f32 %v2456, 0.0
        %v2551 = vmax.f32 %v2461, 0.0
        %v2552 = vmax.f32 %v2464, 0.0
        %v2553 = vmax.f32 %v2469, 0.0
        %v2554 = vmax.f32 %v2472, 0.0
        %v2555 = vmax.f32 %v2477, 0.0
        %v2556 = vmax.f32 %v2480, 0.0
        %v2557 = vmax.f32 %v2485, 0.0
        %v2558 = vmax.f32 %v2488, 0.0
        %v2559 = vmax.f32 %v2493, 0.0
        %v2560 = vmax.f32 %v2496, 0.0
        %v2561 = vmax.f32 %v2501, 0.0
        %v2562 = vmax.f32 %v2504, 0.0
        %v2563 = vmax.f32 %v2509, 0.0
        %v2564 = vmax.f32 %v2512, 0.0
        %v2565 = vmax.f32 %v2517, 0.0
        %v2566 = vmax.f32 %v2520, 0.0
        %v2567 = vmax.f32 %v2525, 0.0
        %v2568 = vmax.f32 %v2528, 0.0
        %v2569 = vmax.f32 %v2533, 0.0
        %v2570 = vmax.f32 %v2536, 0.0
        %v2571 = vpack.c.bf16 %v2540, %v2539
        %v2572 = vpack.c.bf16 %v2542, %v2541
        %v2573 = vpack.c.bf16 %v2544, %v2543
        %v2574 = vpack.c.bf16 %v2546, %v2545
        %v2575 = vpack.c.bf16 %v2548, %v2547
        %v2576 = vpack.c.bf16 %v2550, %v2549
        %v2577 = vpack.c.bf16 %v2552, %v2551
        %v2578 = vpack.c.bf16 %v2554, %v2553
        %v2579 = vpack.c.bf16 %v2556, %v2555
        %v2580 = vpack.c.bf16 %v2558, %v2557
        %v2581 = vpack.c.bf16 %v2560, %v2559
        %v2582 = vpack.c.bf16 %v2562, %v2561
        %v2583 = vpack.c.bf16 %v2564, %v2563
        %v2584 = vpack.c.bf16 %v2566, %v2565
        %v2585 = vpack.c.bf16 %v2568, %v2567
        %v2586 = vpack.c.bf16 %v2570, %v2569
        %v2587 = vld [vmem:[#allocation8] sm:$0xf]
        %v2588 = vld [vmem:[#allocation8 + $0x4] sm:$0xf]
        %v2589 = vld [vmem:[#allocation8 + $0x8] sm:$0xf]
        %v2590 = vld [vmem:[#allocation8 + $0xc] sm:$0xf]
        %v2591 = vld [vmem:[#allocation8 + $0x10] sm:$0xf]
        %v2592 = vld [vmem:[#allocation8 + $0x14] sm:$0xf]
        %v2593 = vld [vmem:[#allocation8 + $0x18] sm:$0xf]
        %v2594 = vld [vmem:[#allocation8 + $0x1c] sm:$0xf]
        %v2595 = vld [vmem:[#allocation8 + $0x20] sm:$0xf]
        %v2596 = vld [vmem:[#allocation8 + $0x24] sm:$0xf]
        %v2597 = vld [vmem:[#allocation8 + $0x28] sm:$0xf]
        %v2598 = vld [vmem:[#allocation8 + $0x2c] sm:$0xf]
        %v2599 = vld [vmem:[#allocation8 + $0x30] sm:$0xf]
        %v2600 = vld [vmem:[#allocation8 + $0x34] sm:$0xf]
        %v2601 = vld [vmem:[#allocation8 + $0x38] sm:$0xf]
        %v2602 = vld [vmem:[#allocation8 + $0x3c] sm:$0xf]
        %v2603 = vld [vmem:[#allocation10] sm:$0x1]
        %v2605 = vlaneseq
        %v2606 = vshrl.u32 %v2605, 7
        %v2607 = vsub.s32 0, %v2606
        %v2608 = vrot.slane %v2603, %v2607
        %v2626 = vunpack.c.l.b16 %v2587
        %v2627 = vunpack.c.l.b16 %v2588
        %v2628 = vunpack.c.l.b16 %v2589
        %v2629 = vunpack.c.l.b16 %v2590
        %v2630 = vunpack.c.l.b16 %v2591
        %v2631 = vunpack.c.l.b16 %v2592
        %v2632 = vunpack.c.l.b16 %v2593
        %v2633 = vunpack.c.l.b16 %v2594
        %v2634 = vunpack.c.l.b16 %v2595
        %v2635 = vunpack.c.l.b16 %v2596
        %v2636 = vunpack.c.l.b16 %v2597
        %v2637 = vunpack.c.l.b16 %v2598
        %v2638 = vunpack.c.l.b16 %v2599
        %v2639 = vunpack.c.l.b16 %v2600
        %v2640 = vunpack.c.l.b16 %v2601
        %v2641 = vunpack.c.l.b16 %v2602
        %v2642 = vpack.c.b16 %v2627, %v2626
        %v2643 = vpack.c.b16 %v2629, %v2628
        %v2644 = vpack.c.b16 %v2631, %v2630
        %v2645 = vpack.c.b16 %v2633, %v2632
        %v2646 = vpack.c.b16 %v2635, %v2634
        %v2647 = vpack.c.b16 %v2637, %v2636
        %v2648 = vpack.c.b16 %v2639, %v2638
        %v2649 = vpack.c.b16 %v2641, %v2640
        %2658 = vmatprep.subr.bf16.mxu0 0
        %2659 = vmatpush1.bf16.msra.mxu0 %v2649
        %2660 = vmatprep.subr.bf16.mxu0 0
        %2661 = vmatpush1.bf16.msra.mxu0 %v2648
        %2662 = vmatprep.subr.bf16.mxu0 0
        %2663 = vmatpush1.bf16.msra.mxu0 %v2647
        %2664 = vmatprep.subr.bf16.mxu0 0
        %2665 = vmatpush1.bf16.msra.mxu0 %v2646
        %2666 = vmatprep.subr.bf16.mxu0 0
        %2667 = vmatpush1.bf16.msra.mxu0 %v2645
        %2668 = vmatprep.subr.bf16.mxu0 0
        %2669 = vmatpush1.bf16.msra.mxu0 %v2644
        %2670 = vmatprep.subr.bf16.mxu0 0
        %2671 = vmatpush1.bf16.msra.mxu0 %v2643
        %2672 = vmatprep.subr.bf16.mxu0 0
        %2673 = vmatpush1.bf16.msra.mxu0 %v2642
        %2674 = vmatprep.subr.bf16.mxu0 0
        %2675 = vmatpush2.bf16.msra.mxu0 0
        %2676 = vmatprep.subr.bf16.mxu0 0
        %2677 = vmatpush2.bf16.msra.mxu0 0
        %2678 = vmatprep.subr.bf16.mxu0 0
        %2679 = vmatpush2.bf16.msra.mxu0 0
        %2680 = vmatprep.subr.bf16.mxu0 0
        %2681 = vmatpush2.bf16.msra.mxu0 0
        %2682 = vmatprep.subr.bf16.mxu0 0
        %2683 = vmatpush2.bf16.msra.mxu0 0
        %2684 = vmatprep.subr.bf16.mxu0 0
        %2685 = vmatpush2.bf16.msra.mxu0 0
        %2686 = vmatprep.subr.bf16.mxu0 0
        %2687 = vmatpush2.bf16.msra.mxu0 0
        %2688 = vmatprep.subr.bf16.mxu0 0
        %2689 = vmatpush2.bf16.msra.mxu0 0
        %2690 = vmatprep.mubr.bf16.mxu0 0
        %2691 = vmatmul.mubr.bf16.gmra.mxu0 %v2571
        %v2692 = vpop.f32.mrf.mxu0
        %v2693 = vadd.f32 %v2608, %v2692
        %v2694 = vpop.f32.mrf.mxu0
        %v2695 = vpop.f32.mrf.mxu0
        %v2696 = vadd.f32 %v2608, %v2695
        %v2697 = vpop.f32.mrf.mxu0
        %2698 = vmatprep.mubr.bf16.mxu0 0
        %2699 = vmatmul.mubr.bf16.gmra.mxu0 %v2572
        %v2700 = vpop.f32.mrf.mxu0
        %v2701 = vadd.f32 %v2608, %v2700
        %v2702 = vpop.f32.mrf.mxu0
        %v2703 = vpop.f32.mrf.mxu0
        %v2704 = vadd.f32 %v2608, %v2703
        %v2705 = vpop.f32.mrf.mxu0
        %2706 = vmatprep.mubr.bf16.mxu0 0
        %2707 = vmatmul.mubr.bf16.gmra.mxu0 %v2573
        %v2708 = vpop.f32.mrf.mxu0
        %v2709 = vadd.f32 %v2608, %v2708
        %v2710 = vpop.f32.mrf.mxu0
        %v2711 = vpop.f32.mrf.mxu0
        %v2712 = vadd.f32 %v2608, %v2711
        %v2713 = vpop.f32.mrf.mxu0
        %2714 = vmatprep.mubr.bf16.mxu0 0
        %2715 = vmatmul.mubr.bf16.gmra.mxu0 %v2574
        %v2716 = vpop.f32.mrf.mxu0
        %v2717 = vadd.f32 %v2608, %v2716
        %v2718 = vpop.f32.mrf.mxu0
        %v2719 = vpop.f32.mrf.mxu0
        %v2720 = vadd.f32 %v2608, %v2719
        %v2721 = vpop.f32.mrf.mxu0
        %2722 = vmatprep.mubr.bf16.mxu0 0
        %2723 = vmatmul.mubr.bf16.gmra.mxu0 %v2575
        %v2724 = vpop.f32.mrf.mxu0
        %v2725 = vadd.f32 %v2608, %v2724
        %v2726 = vpop.f32.mrf.mxu0
        %v2727 = vpop.f32.mrf.mxu0
        %v2728 = vadd.f32 %v2608, %v2727
        %v2729 = vpop.f32.mrf.mxu0
        %2730 = vmatprep.mubr.bf16.mxu0 0
        %2731 = vmatmul.mubr.bf16.gmra.mxu0 %v2576
        %v2732 = vpop.f32.mrf.mxu0
        %v2733 = vadd.f32 %v2608, %v2732
        %v2734 = vpop.f32.mrf.mxu0
        %v2735 = vpop.f32.mrf.mxu0
        %v2736 = vadd.f32 %v2608, %v2735
        %v2737 = vpop.f32.mrf.mxu0
        %2738 = vmatprep.mubr.bf16.mxu0 0
        %2739 = vmatmul.mubr.bf16.gmra.mxu0 %v2577
        %v2740 = vpop.f32.mrf.mxu0
        %v2741 = vadd.f32 %v2608, %v2740
        %v2742 = vpop.f32.mrf.mxu0
        %v2743 = vpop.f32.mrf.mxu0
        %v2744 = vadd.f32 %v2608, %v2743
        %v2745 = vpop.f32.mrf.mxu0
        %2746 = vmatprep.mubr.bf16.mxu0 0
        %2747 = vmatmul.mubr.bf16.gmra.mxu0 %v2578
        %v2748 = vpop.f32.mrf.mxu0
        %v2749 = vadd.f32 %v2608, %v2748
        %v2750 = vpop.f32.mrf.mxu0
        %v2751 = vpop.f32.mrf.mxu0
        %v2752 = vadd.f32 %v2608, %v2751
        %v2753 = vpop.f32.mrf.mxu0
        %2754 = vmatprep.mubr.bf16.mxu0 0
        %2755 = vmatmul.mubr.bf16.gmra.mxu0 %v2579
        %v2756 = vpop.f32.mrf.mxu0
        %v2757 = vadd.f32 %v2608, %v2756
        %v2758 = vpop.f32.mrf.mxu0
        %v2759 = vpop.f32.mrf.mxu0
        %v2760 = vadd.f32 %v2608, %v2759
        %v2761 = vpop.f32.mrf.mxu0
        %2762 = vmatprep.mubr.bf16.mxu0 0
        %2763 = vmatmul.mubr.bf16.gmra.mxu0 %v2580
        %v2764 = vpop.f32.mrf.mxu0
        %v2765 = vadd.f32 %v2608, %v2764
        %v2766 = vpop.f32.mrf.mxu0
        %v2767 = vpop.f32.mrf.mxu0
        %v2768 = vadd.f32 %v2608, %v2767
        %v2769 = vpop.f32.mrf.mxu0
        %2770 = vmatprep.mubr.bf16.mxu0 0
        %2771 = vmatmul.mubr.bf16.gmra.mxu0 %v2581
        %v2772 = vpop.f32.mrf.mxu0
        %v2773 = vadd.f32 %v2608, %v2772
        %v2774 = vpop.f32.mrf.mxu0
        %v2775 = vpop.f32.mrf.mxu0
        %v2776 = vadd.f32 %v2608, %v2775
        %v2777 = vpop.f32.mrf.mxu0
        %2778 = vmatprep.mubr.bf16.mxu0 0
        %2779 = vmatmul.mubr.bf16.gmra.mxu0 %v2582
        %v2780 = vpop.f32.mrf.mxu0
        %v2781 = vadd.f32 %v2608, %v2780
        %v2782 = vpop.f32.mrf.mxu0
        %v2783 = vpop.f32.mrf.mxu0
        %v2784 = vadd.f32 %v2608, %v2783
        %v2785 = vpop.f32.mrf.mxu0
        %2786 = vmatprep.mubr.bf16.mxu0 0
        %2787 = vmatmul.mubr.bf16.gmra.mxu0 %v2583
        %v2788 = vpop.f32.mrf.mxu0
        %v2789 = vadd.f32 %v2608, %v2788
        %v2790 = vpop.f32.mrf.mxu0
        %v2791 = vpop.f32.mrf.mxu0
        %v2792 = vadd.f32 %v2608, %v2791
        %v2793 = vpop.f32.mrf.mxu0
        %2794 = vmatprep.mubr.bf16.mxu0 0
        %2795 = vmatmul.mubr.bf16.gmra.mxu0 %v2584
        %v2796 = vpop.f32.mrf.mxu0
        %v2797 = vadd.f32 %v2608, %v2796
        %v2798 = vpop.f32.mrf.mxu0
        %v2799 = vpop.f32.mrf.mxu0
        %v2800 = vadd.f32 %v2608, %v2799
        %v2801 = vpop.f32.mrf.mxu0
        %2802 = vmatprep.mubr.bf16.mxu0 0
        %2803 = vmatmul.mubr.bf16.gmra.mxu0 %v2585
        %v2804 = vpop.f32.mrf.mxu0
        %v2805 = vadd.f32 %v2608, %v2804
        %v2806 = vpop.f32.mrf.mxu0
        %v2807 = vpop.f32.mrf.mxu0
        %v2808 = vadd.f32 %v2608, %v2807
        %v2809 = vpop.f32.mrf.mxu0
        %2810 = vmatprep.mubr.bf16.mxu0 0
        %2811 = vmatmul.mubr.bf16.gmra.mxu0 %v2586
        %v2812 = vpop.f32.mrf.mxu0
        %v2813 = vadd.f32 %v2608, %v2812
        %v2814 = vpop.f32.mrf.mxu0
        %v2815 = vpop.f32.mrf.mxu0
        %v2816 = vadd.f32 %v2608, %v2815
        %v2817 = vpop.f32.mrf.mxu0
        %2818 = vdwg.mxu0
        %v2819 = vpack.c.bf16 %v2696, %v2693
        %v2820 = vpack.c.bf16 %v2704, %v2701
        %v2821 = vpack.c.bf16 %v2712, %v2709
        %v2822 = vpack.c.bf16 %v2720, %v2717
        %v2823 = vpack.c.bf16 %v2728, %v2725
        %v2824 = vpack.c.bf16 %v2736, %v2733
        %v2825 = vpack.c.bf16 %v2744, %v2741
        %v2826 = vpack.c.bf16 %v2752, %v2749
        %v2827 = vpack.c.bf16 %v2760, %v2757
        %v2828 = vpack.c.bf16 %v2768, %v2765
        %v2829 = vpack.c.bf16 %v2776, %v2773
        %v2830 = vpack.c.bf16 %v2784, %v2781
        %v2831 = vpack.c.bf16 %v2792, %v2789
        %v2832 = vpack.c.bf16 %v2800, %v2797
        %v2833 = vpack.c.bf16 %v2808, %v2805
        %v2834 = vpack.c.bf16 %v2816, %v2813
        %v2851 = vunpack.c.l.b16 %v2819
        %v2852 = vunpack.c.h.b16 %v2819
        %v2853 = vunpack.c.l.b16 %v2820
        %v2854 = vunpack.c.h.b16 %v2820
        %v2855 = vunpack.c.l.b16 %v2821
        %v2856 = vunpack.c.h.b16 %v2821
        %v2857 = vunpack.c.l.b16 %v2822
        %v2858 = vunpack.c.h.b16 %v2822
        %v2859 = vunpack.c.l.b16 %v2823
        %v2860 = vunpack.c.h.b16 %v2823
        %v2861 = vunpack.c.l.b16 %v2824
        %v2862 = vunpack.c.h.b16 %v2824
        %v2863 = vunpack.c.l.b16 %v2825
        %v2864 = vunpack.c.h.b16 %v2825
        %v2865 = vunpack.c.l.b16 %v2826
        %v2866 = vunpack.c.h.b16 %v2826
        %v2867 = vunpack.c.l.b16 %v2827
        %v2868 = vunpack.c.h.b16 %v2827
        %v2869 = vunpack.c.l.b16 %v2828
        %v2870 = vunpack.c.h.b16 %v2828
        %v2871 = vunpack.c.l.b16 %v2829
        %v2872 = vunpack.c.h.b16 %v2829
        %v2873 = vunpack.c.l.b16 %v2830
        %v2874 = vunpack.c.h.b16 %v2830
        %v2875 = vunpack.c.l.b16 %v2831
        %v2876 = vunpack.c.h.b16 %v2831
        %v2877 = vunpack.c.l.b16 %v2832
        %v2878 = vunpack.c.h.b16 %v2832
        %v2879 = vunpack.c.l.b16 %v2833
        %v2880 = vunpack.c.h.b16 %v2833
        %v2881 = vunpack.c.l.b16 %v2834
        %v2882 = vunpack.c.h.b16 %v2834
        %v2883 = vpack.c.b16 %v2851, %v2851
        %v2884 = vpack.c.b16 %v2852, %v2852
        %v2885 = vpack.c.b16 %v2853, %v2853
        %v2886 = vpack.c.b16 %v2854, %v2854
        %v2887 = vpack.c.b16 %v2855, %v2855
        %v2888 = vpack.c.b16 %v2856, %v2856
        %v2889 = vpack.c.b16 %v2857, %v2857
        %v2890 = vpack.c.b16 %v2858, %v2858
        %v2891 = vpack.c.b16 %v2859, %v2859
        %v2892 = vpack.c.b16 %v2860, %v2860
        %v2893 = vpack.c.b16 %v2861, %v2861
        %v2894 = vpack.c.b16 %v2862, %v2862
        %v2895 = vpack.c.b16 %v2863, %v2863
        %v2896 = vpack.c.b16 %v2864, %v2864
        %v2897 = vpack.c.b16 %v2865, %v2865
        %v2898 = vpack.c.b16 %v2866, %v2866
        %v2899 = vpack.c.b16 %v2867, %v2867
        %v2900 = vpack.c.b16 %v2868, %v2868
        %v2901 = vpack.c.b16 %v2869, %v2869
        %v2902 = vpack.c.b16 %v2870, %v2870
        %v2903 = vpack.c.b16 %v2871, %v2871
        %v2904 = vpack.c.b16 %v2872, %v2872
        %v2905 = vpack.c.b16 %v2873, %v2873
        %v2906 = vpack.c.b16 %v2874, %v2874
        %v2907 = vpack.c.b16 %v2875, %v2875
        %v2908 = vpack.c.b16 %v2876, %v2876
        %v2909 = vpack.c.b16 %v2877, %v2877
        %v2910 = vpack.c.b16 %v2878, %v2878
        %v2911 = vpack.c.b16 %v2879, %v2879
        %v2912 = vpack.c.b16 %v2880, %v2880
        %v2913 = vpack.c.b16 %v2881, %v2881
        %v2914 = vpack.c.b16 %v2882, %v2882
        %2947 = vst [vmem:[%s340] sm:$0xf] %v2883
        %2948 = vst [vmem:[%s340 + $0x4] sm:$0xf] %v2884
        %2949 = vst [vmem:[%s340 + $0x8] sm:$0xf] %v2885
        %2950 = vst [vmem:[%s340 + $0xc] sm:$0xf] %v2886
        %2951 = vst [vmem:[%s340 + $0x10] sm:$0xf] %v2887
        %2952 = vst [vmem:[%s340 + $0x14] sm:$0xf] %v2888
        %2953 = vst [vmem:[%s340 + $0x18] sm:$0xf] %v2889
        %2954 = vst [vmem:[%s340 + $0x1c] sm:$0xf] %v2890
        %2955 = vst [vmem:[%s340 + $0x20] sm:$0xf] %v2891
        %2956 = vst [vmem:[%s340 + $0x24] sm:$0xf] %v2892
        %2957 = vst [vmem:[%s340 + $0x28] sm:$0xf] %v2893
        %2958 = vst [vmem:[%s340 + $0x2c] sm:$0xf] %v2894
        %2959 = vst [vmem:[%s340 + $0x30] sm:$0xf] %v2895
        %2960 = vst [vmem:[%s340 + $0x34] sm:$0xf] %v2896
        %2961 = vst [vmem:[%s340 + $0x38] sm:$0xf] %v2897
        %2962 = vst [vmem:[%s340 + $0x3c] sm:$0xf] %v2898
        %2963 = vst [vmem:[%s340 + $0x40] sm:$0xf] %v2899
        %2964 = vst [vmem:[%s340 + $0x44] sm:$0xf] %v2900
        %2965 = vst [vmem:[%s340 + $0x48] sm:$0xf] %v2901
        %2966 = vst [vmem:[%s340 + $0x4c] sm:$0xf] %v2902
        %2967 = vst [vmem:[%s340 + $0x50] sm:$0xf] %v2903
        %2968 = vst [vmem:[%s340 + $0x54] sm:$0xf] %v2904
        %2969 = vst [vmem:[%s340 + $0x58] sm:$0xf] %v2905
        %2970 = vst [vmem:[%s340 + $0x5c] sm:$0xf] %v2906
        %2971 = vst [vmem:[%s340 + $0x60] sm:$0xf] %v2907
        %2972 = vst [vmem:[%s340 + $0x64] sm:$0xf] %v2908
        %2973 = vst [vmem:[%s340 + $0x68] sm:$0xf] %v2909
        %2974 = vst [vmem:[%s340 + $0x6c] sm:$0xf] %v2910
        %2975 = vst [vmem:[%s340 + $0x70] sm:$0xf] %v2911
        %2976 = vst [vmem:[%s340 + $0x74] sm:$0xf] %v2912
        %2977 = vst [vmem:[%s340 + $0x78] sm:$0xf] %v2913
        %2978 = vst [vmem:[%s340 + $0x7c] sm:$0xf] %v2914
        %s2979 = sand.u32 %s169, 1
        %s2980 = scalar_lea.sflag [#allocation4], %s2979
        %s2981 = sand.u32 %s169, 1
        %s2982 = smul.addr %s2981, 128
        %s2983 = scalar_lea.vmem [#allocation11], %s2982
        // Predicated region
        $region65: #{tpu_custom_call.1} parent=43 // pred_check
          %p2984 = pneg %p179
        $region66: #{tpu_custom_call.1} parent=43 // pred_check_branch
          %2986 = sbr.rel (%p2984) target = $region68
        $region67: #{tpu_custom_call.1} parent=43 // pred_region
          %s2987 = smul.u32 32, %s25
          %s2989 = ssub.s32 2048, 2048
          %2990 = vsyncadd %s2980, %s2989
          %s2991 = smul.addr %s2987, 64
          %s2992 = scalar_lea.hbm %s6, %s2991
          %s2993 = sshll.u32 %s2983, 4
          %s2994 = int_to_ptr.vmem [resolvable:$true] %s2993
          %2999 = dma.vmem_to_hbm [thread:$0]  %s2994, 2048, %s2992, %s2980, 64, 64, 4
        $region68: #{tpu_custom_call.1} parent=43 // pred_fallthru
          _
      $region44: #{tpu_custom_call.1} parent=5 // pred_fallthru
        _
      %p3000 = scmp.le.s32.totalorder 2, %s20
      // Predicated region
      $region69: #{tpu_custom_call.1} parent=5 // pred_check
        %p3001 = pneg %p3000
      $region70: #{tpu_custom_call.1} parent=5 // pred_check_branch
        %3003 = sbr.rel (%p3001) target = $region72
      $region71: #{tpu_custom_call.1} parent=5 // pred_region
        %s3004 = ssub.s32 %s20, 2
        // Predicated region
        $region73: #{tpu_custom_call.1} parent=71 // pred_check
          %p3005 = pneg %p185
        $region74: #{tpu_custom_call.1} parent=71 // pred_check_branch
          %3007 = sbr.rel (%p3005) target = $region76
        $region75: #{tpu_custom_call.1} parent=71 // pred_region
          %s3008 = sand.u32 %s170, 1
          %s3009 = scalar_lea.sflag [#allocation4], %s3008
          %s3010 = sand.u32 %s170, 1
          %s3011 = smul.addr %s3010, 128
          %s3012 = scalar_lea.vmem [#allocation11], %s3011
          %3013 = dma.done %s3009, 2048
        $region76: #{tpu_custom_call.1} parent=71 // pred_fallthru
          _
      $region72: #{tpu_custom_call.1} parent=5 // pred_fallthru
        _
    $region6: #{tpu_custom_call.1} parent=1 // loop_footer
      %s24 = sadd.s32 1, %s20
    $region7: #{tpu_custom_call.1} parent=1 // loop_footer_branch
      %19 = sbr.rel target = $region3
    $region8: #{tpu_custom_call.1} parent=1 // loop_exit
      _
    %3014 = vsyncpa [#allocation3], 1
    %s3015 = scalar_lea.sflag [#allocation3], 1
    %3016 = vsyncpa %s3015, 1
    %3017 = vsyncpa [#allocation6], 1
    %3018 = vsyncpa [#allocation9], 1
    %3019 = vsyncpa [#allocation4], 1
    %s3020 = scalar_lea.sflag [#allocation4], 1
    %3021 = vsyncpa %s3020, 1

</llo_original>
